<compile_context>
chip_gen: v7x
topology: tpu7x:2x2x1
jax: 0.10.0
libtpu: 0.0.40
codegen_flags: <defaults>
</compile_context>

<pallas_src>
import math
import functools

import jax
import jax.numpy as jnp
from jax import lax
from jax.experimental import pallas as pl
from jax.experimental.pallas import tpu as pltpu


def block_kernel(xq_ref, xf_ref,
                 wq_ref, bq_ref, wkv_ref, bkv_ref,
                 wp_ref, bp_ref,
                 w1_ref, b1_ref, w2_ref, b2_ref,
                 o_ref,
                 kv_ref,                      # VMEM scratch (T, 2C) bf16 — cached K|V
                 *, n_heads: int, tq: int):
    qi = pl.program_id(1)

    xq = xq_ref[0]                            # (TQ, C) f32 — query rows / residual stream
    TQ, C = xq.shape
    T = kv_ref.shape[0]
    N = n_heads
    D = C // N
    inv_sqrt_d = 1.0 / math.sqrt(D)

    # K/V projection: only for the first query tile of each batch element; cached in
    # VMEM scratch (bf16) and reused by subsequent query tiles (axis 1 is "arbitrary").
    @pl.when(qi == 0)
    def _():
        xf = xf_ref[0]                        # (T, C) bf16 (pre-cast host-side)
        kv = jnp.dot(xf, wkv_ref[...], preferred_element_type=jnp.float32) + bkv_ref[...]
        kv_ref[...] = kv.astype(jnp.bfloat16)

    # Q projection for this query tile; fold 1/sqrt(D) into Q once (not into scores).
    q = jnp.dot(xq.astype(jnp.bfloat16), wq_ref[...],
                preferred_element_type=jnp.float32) + bq_ref[...]
    q_b = (q * inv_sqrt_d).astype(jnp.bfloat16)        # (TQ, C) bf16

    kv = kv_ref[...]                                    # (T, 2C) bf16, single load
    k_b = kv[:, :C]
    v_b = kv[:, C:]

    # Causal mask for this query tile: global query row (qi*TQ + r) attends keys <= row.
    # Diagonal is always unmasked, so no fully -inf row (no NaN from softmax).
    row = qi * tq + lax.broadcasted_iota(jnp.int32, (TQ, T), 0)
    col = lax.broadcasted_iota(jnp.int32, (TQ, T), 1)
    causal = col <= row

    # Per-head attention (static unroll, N small). The (TQ, T) score tensor exists per
    # head only; head outputs are concatenated and combined by a single matmul.
    heads = []
    for h in range(N):
        lo, hi = h * D, (h + 1) * D
        qh = q_b[:, lo:hi]                              # (TQ, D) bf16 (scale folded in)
        kh = k_b[:, lo:hi]                              # (T,  D) bf16
        vh = v_b[:, lo:hi]                              # (T,  D) bf16

        # Contract over D directly — no materialized K transpose (saves XLU work).
        s = lax.dot_general(qh, kh, (((1,), (1,)), ((), ())),
                            preferred_element_type=jnp.float32)    # (TQ, T) f32
        s = jnp.where(causal, s, -jnp.inf)
        m = jnp.max(s, axis=-1, keepdims=True)
        e = jnp.exp(s - m)
        denom = jnp.sum(e, axis=-1, keepdims=True)
        # Deferred normalization: scale the (TQ, D) output instead of the (TQ, T) probs.
        ah = jnp.dot(e.astype(jnp.bfloat16), vh, preferred_element_type=jnp.float32)
        # NOTE: approx reciprocal (EUP) — fine for inference tolerances, not for training.
        ah = ah * pl.reciprocal(denom, approx=True)
        heads.append(ah.astype(jnp.bfloat16))

    att = jnp.concatenate(heads, axis=1)                # (TQ, C) bf16
    att_out = jnp.dot(att, wp_ref[...],
                      preferred_element_type=jnp.float32) + bp_ref[...]

    hres = xq + att_out                                  # residual 1 (f32)

    # MLP: Linear -> ReLU -> Linear; hidden is only (TQ, H) thanks to query tiling.
    hid = jnp.dot(hres.astype(jnp.bfloat16), w1_ref[...],
                  preferred_element_type=jnp.float32) + b1_ref[...]
    hid = jnp.maximum(hid, 0.0)
    mlp = jnp.dot(hid.astype(jnp.bfloat16), w2_ref[...],
                  preferred_element_type=jnp.float32) + b2_ref[...]

    o_ref[0] = (hres + mlp).astype(o_ref.dtype)          # residual 2


# ----------------------------------------------------------------------------- host side


def _vmem_limit_bytes():
    """Generation-aware scoped-VMEM limit. Benign capability probe only."""
    default = 32 * 1024 * 1024
    try:
        info = pltpu.get_tpu_info()
    except Exception:                      # probe only — never guards kernel execution
        return default
    cap = getattr(info, "vmem_capacity_bytes", None)
    if not cap:
        return default
    # Leave headroom below physical VMEM (v7x: 64 MiB, v5e/v6e: 128 MiB).
    return int(max(default, min(cap - 16 * 1024 * 1024, 100 * 1024 * 1024)))


def _choose_tq(T, vmem_limit):
    """Query-tile size: larger tiles where VMEM allows (amortize per-step overhead)."""
    max_tq = 256 if vmem_limit <= 48 * 1024 * 1024 else 512
    tq = max_tq
    while tq >= 128:
        if T % tq == 0 and T > tq:
            return tq
        tq //= 2
    return T


def pack_params(params):
    """Fuse K|V weights and pre-cast matmul weights to bf16 (biases stay f32).

    Call once, outside the per-step path.
    """
    wkv = jnp.concatenate([params['wk'], params['wv']], axis=1)
    bkv = jnp.concatenate([params['bk'], params['bv']], axis=1)
    return dict(
        wq=params['wq'].astype(jnp.bfloat16), bq=params['bq'],
        wkv=wkv.astype(jnp.bfloat16), bkv=bkv,
        wp=params['wp'].astype(jnp.bfloat16), bp=params['bp'],
        w1=params['w1'].astype(jnp.bfloat16), b1=params['b1'],
        w2=params['w2'].astype(jnp.bfloat16), b2=params['b2'],
    )


def make_block_forward(B, T, C, H, n_heads, dtype=jnp.float32):
    vmem_limit = _vmem_limit_bytes()
    tq = _choose_tq(T, vmem_limit)
    assert T % tq == 0
    nq = T // tq

    # Grid-invariant weights/biases: whole array resident in VMEM, single copy
    # (no per-step re-DMA, no double-buffering).
    wfull = pl.BlockSpec(memory_space=pltpu.MemorySpace.VMEM)

    kernel = functools.partial(block_kernel, n_heads=n_heads, tq=tq)
    call = pl.pallas_call(
        kernel,
        out_shape=jax.ShapeDtypeStruct((B, T, C), dtype),
        grid_spec=pltpu.PrefetchScalarGridSpec(
            num_scalar_prefetch=0,
            grid=(B, nq),
            in_specs=[
                pl.BlockSpec((1, tq, C), lambda b, q: (b, q, 0)),   # x (f32 query tile)
                pl.BlockSpec((1, T, C), lambda b, q: (b, 0, 0)),    # x (bf16, K/V path)
                wfull, wfull,          # q proj
                wfull, wfull,          # fused k|v proj
                wfull, wfull,          # out proj
                wfull, wfull,          # mlp fc1
                wfull, wfull,          # mlp fc2
            ],
            out_specs=pl.BlockSpec((1, tq, C), lambda b, q: (b, q, 0)),
            scratch_shapes=[pltpu.VMEM((T, 2 * C), jnp.bfloat16)],  # cached K|V per batch
        ),
        compiler_params=pltpu.CompilerParams(
            # Query-tile axis carries the K/V cache state -> "arbitrary"; batch parallel.
            dimension_semantics=("parallel", "arbitrary"),
            vmem_limit_bytes=vmem_limit),
    )

    def fwd(x, p):
        return call(x, x.astype(jnp.bfloat16),
                    p['wq'], p['bq'], p['wkv'], p['bkv'],
                    p['wp'], p['bp'], p['w1'], p['b1'], p['w2'], p['b2'])

    return jax.jit(fwd)


# ----------------------------------------------------------------------------- reference


def reference_forward(x, params, n_heads):
    """Pure-JAX f32 reference mirroring the PyTorch Block forward (eval mode, no LN)."""
    B, T, C = x.shape
    N, D = n_heads, C // n_heads
    q = (x @ params['wq'] + params['bq']).reshape(B, T, N, D).transpose(0, 2, 1, 3)
    k = (x @ params['wk'] + params['bk']).reshape(B, T, N, D).transpose(0, 2, 1, 3)
    v = (x @ params['wv'] + params['bv']).reshape(B, T, N, D).transpose(0, 2, 1, 3)
    w = q @ jnp.swapaxes(k, -1, -2) / math.sqrt(D)
    mask = jnp.tril(jnp.ones((T, T)))[None, None]
    w = jnp.where(mask == 0, -jnp.inf, w)
    p = jax.nn.softmax(w, axis=-1)
    att = (p @ v).transpose(0, 2, 1, 3).reshape(B, T, C)
    att = att @ params['wp'] + params['bp']
    h = x + att
    hid = jnp.maximum(h @ params['w1'] + params['b1'], 0.0)
    return h + (hid @ params['w2'] + params['b2'])


def init_params(key, h_dim, widening_factor):
    scale = 1.0 / math.sqrt(h_dim)
    ks = jax.random.split(key, 6)
    H = widening_factor * h_dim
    # Attention linears: normal(0, 1/sqrt(h_dim)), zero bias (matches init_weights).
    # Weights stored pre-transposed so the kernel computes x @ W.
    return {
        'wq': scale * jax.random.normal(ks[0], (h_dim, h_dim), jnp.float32),
        'wk': scale * jax.random.normal(ks[1], (h_dim, h_dim), jnp.float32),
        'wv': scale * jax.random.normal(ks[2], (h_dim, h_dim), jnp.float32),
        'wp': scale * jax.random.normal(ks[3], (h_dim, h_dim), jnp.float32),
        'bq': jnp.zeros((1, h_dim), jnp.float32),
        'bk': jnp.zeros((1, h_dim), jnp.float32),
        'bv': jnp.zeros((1, h_dim), jnp.float32),
        'bp': jnp.zeros((1, h_dim), jnp.float32),
        # MLP linears: deterministic small normal init (synthetic weights).
        'w1': 0.02 * jax.random.normal(ks[4], (h_dim, H), jnp.float32),
        'b1': jnp.zeros((1, H), jnp.float32),
        'w2': 0.02 * jax.random.normal(ks[5], (H, h_dim), jnp.float32),
        'b2': jnp.zeros((1, h_dim), jnp.float32),
    }


if __name__ == "__main__":
    B, T, h_dim, n_heads, widening = 2, 8, 32, 4, 4

    key = jax.random.PRNGKey(0)
    kx, kp = jax.random.split(key)
    x = jax.random.normal(kx, (B, T, h_dim), jnp.float32)
    params = init_params(kp, h_dim, widening)

    packed = pack_params(params)                                  # hoisted, done once
    fwd = make_block_forward(B, T, h_dim, widening * h_dim, n_heads)

    out = jax.block_until_ready(fwd(x, packed))

    ref = reference_forward(x, params, n_heads)
    assert out.shape == (B, T, h_dim)
    # bf16 MXU operands (f32 accumulation) + approx reciprocal => loosened tolerance.
    assert jnp.allclose(out, ref, atol=1e-1, rtol=1e-1), "mismatch vs reference"

    print("KERNEL_OK")
</pallas_src>

<mosaic_0001>
module attributes {stable_mosaic.version = 11 : i64} {
  func.func @block_kernel(%arg0: i32, %arg1: i32, %arg2: memref<1x8x32xf32, #tpu.memory_space<vmem>>, %arg3: memref<1x8x32xbf16, #tpu.memory_space<vmem>>, %arg4: memref<32x32xbf16, #tpu.memory_space<vmem>>, %arg5: memref<1x32xf32, #tpu.memory_space<vmem>>, %arg6: memref<32x64xbf16, #tpu.memory_space<vmem>>, %arg7: memref<1x64xf32, #tpu.memory_space<vmem>>, %arg8: memref<32x32xbf16, #tpu.memory_space<vmem>>, %arg9: memref<1x32xf32, #tpu.memory_space<vmem>>, %arg10: memref<32x128xbf16, #tpu.memory_space<vmem>>, %arg11: memref<1x128xf32, #tpu.memory_space<vmem>>, %arg12: memref<128x32xbf16, #tpu.memory_space<vmem>>, %arg13: memref<1x32xf32, #tpu.memory_space<vmem>>, %arg14: memref<1x8x32xf32, #tpu.memory_space<vmem>>, %arg15: memref<8x64xbf16, #tpu.memory_space<vmem>>) attributes {dimension_semantics = [#tpu.dimension_semantics<parallel>, #tpu.dimension_semantics<arbitrary>], iteration_bounds = array<i64: 2, 1>, scalar_prefetch = 0 : i64, scratch_operands = 1 : i64, tpu.core_type = #tpu.core_type<tc>, window_params = [{transform_indices = @transform_0, window_bounds = array<i64: 1, 8, 32>}, {transform_indices = @transform_1, window_bounds = array<i64: 1, 8, 32>}, {pipeline_mode = #tpu.pipeline_mode<synchronous>, transform_indices = @transform_2, window_bounds = array<i64: 32, 32>}, {pipeline_mode = #tpu.pipeline_mode<synchronous>, transform_indices = @transform_3, window_bounds = array<i64: 1, 32>}, {pipeline_mode = #tpu.pipeline_mode<synchronous>, transform_indices = @transform_4, window_bounds = array<i64: 32, 64>}, {pipeline_mode = #tpu.pipeline_mode<synchronous>, transform_indices = @transform_5, window_bounds = array<i64: 1, 64>}, {pipeline_mode = #tpu.pipeline_mode<synchronous>, transform_indices = @transform_6, window_bounds = array<i64: 32, 32>}, {pipeline_mode = #tpu.pipeline_mode<synchronous>, transform_indices = @transform_7, window_bounds = array<i64: 1, 32>}, {pipeline_mode = #tpu.pipeline_mode<synchronous>, transform_indices = @transform_8, window_bounds = array<i64: 32, 128>}, {pipeline_mode = #tpu.pipeline_mode<synchronous>, transform_indices = @transform_9, window_bounds = array<i64: 1, 128>}, {pipeline_mode = #tpu.pipeline_mode<synchronous>, transform_indices = @transform_10, window_bounds = array<i64: 128, 32>}, {pipeline_mode = #tpu.pipeline_mode<synchronous>, transform_indices = @transform_11, window_bounds = array<i64: 1, 32>}, {transform_indices = @transform_12, window_bounds = array<i64: 1, 8, 32>}]} {
    %c0 = arith.constant 0 : index
    %c0_0 = arith.constant 0 : index
    %c0_1 = arith.constant 0 : index
    %0 = vector.load %arg2[%c0, %c0_0, %c0_1] : memref<1x8x32xf32, #tpu.memory_space<vmem>>, vector<1x8x32xf32>
    %1 = vector.shape_cast %0 : vector<1x8x32xf32> to vector<8x32xf32>
    %c0_i32 = arith.constant 0 : i32
    %2 = arith.cmpi eq, %arg1, %c0_i32 : i32
    %3 = arith.extui %2 : i1 to i32
    %c0_i32_2 = arith.constant 0 : i32
    %4 = arith.cmpi ne, %3, %c0_i32_2 : i32
    scf.if %4 {
      %c0_49 = arith.constant 0 : index
      %c0_50 = arith.constant 0 : index
      %c0_51 = arith.constant 0 : index
      %124 = vector.load %arg3[%c0_49, %c0_50, %c0_51] : memref<1x8x32xbf16, #tpu.memory_space<vmem>>, vector<1x8x32xbf16>
      %125 = vector.shape_cast %124 : vector<1x8x32xbf16> to vector<8x32xbf16>
      %c0_52 = arith.constant 0 : index
      %c0_53 = arith.constant 0 : index
      %126 = vector.load %arg6[%c0_52, %c0_53] : memref<32x64xbf16, #tpu.memory_space<vmem>>, vector<32x64xbf16>
      %cst_54 = arith.constant dense<0.000000e+00> : vector<8x64xf32>
      %127 = tpu.matmul %125, %126, %cst_54 {dimension_numbers = #tpu.dot_dimension_numbers<[1], [0], [0], [1], [0, 0, 1, 1], [], []>} : vector<8x32xbf16>, vector<32x64xbf16>, vector<8x64xf32> -> vector<8x64xf32>
      %c0_55 = arith.constant 0 : index
      %c0_56 = arith.constant 0 : index
      %128 = vector.load %arg7[%c0_55, %c0_56] : memref<1x64xf32, #tpu.memory_space<vmem>>, vector<1x64xf32>
      %129 = vector.broadcast %128 : vector<1x64xf32> to vector<8x64xf32>
      %130 = arith.addf %127, %129 : vector<8x64xf32>
      %131 = arith.truncf %130 : vector<8x64xf32> to vector<8x64xbf16>
      %c0_57 = arith.constant 0 : index
      %c0_58 = arith.constant 0 : index
      %132 = vector.load %arg15[%c0_57, %c0_58] : memref<8x64xbf16, #tpu.memory_space<vmem>>, vector<8x64xbf16>
      tpu.vector_store %arg15[%c0_57, %c0_58], %131 {strides = array<i32>} : memref<8x64xbf16, #tpu.memory_space<vmem>>, vector<8x64xbf16>,
    } else {
    }
    %5 = arith.truncf %1 : vector<8x32xf32> to vector<8x32xbf16>
    %c0_3 = arith.constant 0 : index
    %c0_4 = arith.constant 0 : index
    %6 = vector.load %arg4[%c0_3, %c0_4] : memref<32x32xbf16, #tpu.memory_space<vmem>>, vector<32x32xbf16>
    %cst = arith.constant dense<0.000000e+00> : vector<8x32xf32>
    %7 = tpu.matmul %5, %6, %cst {dimension_numbers = #tpu.dot_dimension_numbers<[1], [0], [0], [1], [0, 0, 1, 1], [], []>} : vector<8x32xbf16>, vector<32x32xbf16>, vector<8x32xf32> -> vector<8x32xf32>
    %c0_5 = arith.constant 0 : index
    %c0_6 = arith.constant 0 : index
    %8 = vector.load %arg5[%c0_5, %c0_6] : memref<1x32xf32, #tpu.memory_space<vmem>>, vector<1x32xf32>
    %9 = vector.broadcast %8 : vector<1x32xf32> to vector<8x32xf32>
    %10 = arith.addf %7, %9 : vector<8x32xf32>
    %cst_7 = arith.constant 0.353553385 : f32
    %11 = vector.broadcast %cst_7 : f32 to vector<8x32xf32>
    %12 = arith.mulf %10, %11 : vector<8x32xf32>
    %13 = arith.truncf %12 : vector<8x32xf32> to vector<8x32xbf16>
    %c0_8 = arith.constant 0 : index
    %c0_9 = arith.constant 0 : index
    %14 = vector.load %arg15[%c0_8, %c0_9] : memref<8x64xbf16, #tpu.memory_space<vmem>>, vector<8x64xbf16>
    %15 = vector.extract_strided_slice %14 {offsets = [0, 0], sizes = [8, 32], strides = [1, 1]} : vector<8x64xbf16> to vector<8x32xbf16>
    %16 = vector.extract_strided_slice %14 {offsets = [0, 32], sizes = [8, 32], strides = [1, 1]} : vector<8x64xbf16> to vector<8x32xbf16>
    %c8_i32 = arith.constant 8 : i32
    %17 = arith.muli %arg1, %c8_i32 : i32
    %18 = tpu.iota {dimensions = array<i32: 0>} : vector<8x8xi32>
    %19 = vector.broadcast %17 : i32 to vector<8x8xi32>
    %20 = arith.addi %19, %18 : vector<8x8xi32>
    %21 = tpu.iota {dimensions = array<i32: 1>} : vector<8x8xi32>
    %22 = arith.cmpi sle, %21, %20 : vector<8x8xi32>
    %23 = vector.extract_strided_slice %13 {offsets = [0, 0], sizes = [8, 8], strides = [1, 1]} : vector<8x32xbf16> to vector<8x8xbf16>
    %24 = vector.extract_strided_slice %15 {offsets = [0, 0], sizes = [8, 8], strides = [1, 1]} : vector<8x32xbf16> to vector<8x8xbf16>
    %25 = vector.extract_strided_slice %16 {offsets = [0, 0], sizes = [8, 8], strides = [1, 1]} : vector<8x32xbf16> to vector<8x8xbf16>
    %cst_10 = arith.constant dense<0.000000e+00> : vector<8x8xf32>
    %26 = tpu.matmul %23, %24, %cst_10 {dimension_numbers = #tpu.dot_dimension_numbers<[1], [1], [0], [0], [0, 0, 1, 0], [], []>} : vector<8x8xbf16>, vector<8x8xbf16>, vector<8x8xf32> -> vector<8x8xf32>
    %cst_11 = arith.constant 0xFF800000 : f32
    %27 = vector.broadcast %cst_11 : f32 to vector<8x8xf32>
    %28 = arith.select %22, %26, %27 : vector<8x8xi1>, vector<8x8xf32>
    %cst_12 = arith.constant dense<0xFF800000> : vector<8xf32>
    %29 = vector.multi_reduction <maximumf>, %28, %cst_12 [1] : vector<8x8xf32> to vector<8xf32>
    %30 = vector.shape_cast %29 : vector<8xf32> to vector<8x1xf32>
    %31 = vector.broadcast %30 : vector<8x1xf32> to vector<8x8xf32>
    %32 = arith.subf %28, %31 : vector<8x8xf32>
    %33 = math.exp %32 : vector<8x8xf32>
    %cst_13 = arith.constant dense<0.000000e+00> : vector<8xf32>
    %34 = vector.multi_reduction <add>, %33, %cst_13 [1] : vector<8x8xf32> to vector<8xf32>
    %35 = vector.shape_cast %34 : vector<8xf32> to vector<8x1xf32>
    %36 = arith.truncf %33 : vector<8x8xf32> to vector<8x8xbf16>
    %cst_14 = arith.constant dense<0.000000e+00> : vector<8x8xf32>
    %37 = tpu.matmul %36, %25, %cst_14 {dimension_numbers = #tpu.dot_dimension_numbers<[1], [0], [0], [1], [0, 0, 1, 1], [], []>} : vector<8x8xbf16>, vector<8x8xbf16>, vector<8x8xf32> -> vector<8x8xf32>
    %38 = tpu.reciprocal %35 {approx = true} : vector<8x1xf32> -> vector<8x1xf32>
    %39 = vector.broadcast %38 : vector<8x1xf32> to vector<8x8xf32>
    %40 = arith.mulf %37, %39 : vector<8x8xf32>
    %41 = arith.truncf %40 : vector<8x8xf32> to vector<8x8xbf16>
    %42 = vector.extract_strided_slice %13 {offsets = [0, 8], sizes = [8, 8], strides = [1, 1]} : vector<8x32xbf16> to vector<8x8xbf16>
    %43 = vector.extract_strided_slice %15 {offsets = [0, 8], sizes = [8, 8], strides = [1, 1]} : vector<8x32xbf16> to vector<8x8xbf16>
    %44 = vector.extract_strided_slice %16 {offsets = [0, 8], sizes = [8, 8], strides = [1, 1]} : vector<8x32xbf16> to vector<8x8xbf16>
    %cst_15 = arith.constant dense<0.000000e+00> : vector<8x8xf32>
    %45 = tpu.matmul %42, %43, %cst_15 {dimension_numbers = #tpu.dot_dimension_numbers<[1], [1], [0], [0], [0, 0, 1, 0], [], []>} : vector<8x8xbf16>, vector<8x8xbf16>, vector<8x8xf32> -> vector<8x8xf32>
    %cst_16 = arith.constant 0xFF800000 : f32
    %46 = vector.broadcast %cst_16 : f32 to vector<8x8xf32>
    %47 = arith.select %22, %45, %46 : vector<8x8xi1>, vector<8x8xf32>
    %cst_17 = arith.constant dense<0xFF800000> : vector<8xf32>
    %48 = vector.multi_reduction <maximumf>, %47, %cst_17 [1] : vector<8x8xf32> to vector<8xf32>
    %49 = vector.shape_cast %48 : vector<8xf32> to vector<8x1xf32>
    %50 = vector.broadcast %49 : vector<8x1xf32> to vector<8x8xf32>
    %51 = arith.subf %47, %50 : vector<8x8xf32>
    %52 = math.exp %51 : vector<8x8xf32>
    %cst_18 = arith.constant dense<0.000000e+00> : vector<8xf32>
    %53 = vector.multi_reduction <add>, %52, %cst_18 [1] : vector<8x8xf32> to vector<8xf32>
    %54 = vector.shape_cast %53 : vector<8xf32> to vector<8x1xf32>
    %55 = arith.truncf %52 : vector<8x8xf32> to vector<8x8xbf16>
    %cst_19 = arith.constant dense<0.000000e+00> : vector<8x8xf32>
    %56 = tpu.matmul %55, %44, %cst_19 {dimension_numbers = #tpu.dot_dimension_numbers<[1], [0], [0], [1], [0, 0, 1, 1], [], []>} : vector<8x8xbf16>, vector<8x8xbf16>, vector<8x8xf32> -> vector<8x8xf32>
    %57 = tpu.reciprocal %54 {approx = true} : vector<8x1xf32> -> vector<8x1xf32>
    %58 = vector.broadcast %57 : vector<8x1xf32> to vector<8x8xf32>
    %59 = arith.mulf %56, %58 : vector<8x8xf32>
    %60 = arith.truncf %59 : vector<8x8xf32> to vector<8x8xbf16>
    %61 = vector.extract_strided_slice %13 {offsets = [0, 16], sizes = [8, 8], strides = [1, 1]} : vector<8x32xbf16> to vector<8x8xbf16>
    %62 = vector.extract_strided_slice %15 {offsets = [0, 16], sizes = [8, 8], strides = [1, 1]} : vector<8x32xbf16> to vector<8x8xbf16>
    %63 = vector.extract_strided_slice %16 {offsets = [0, 16], sizes = [8, 8], strides = [1, 1]} : vector<8x32xbf16> to vector<8x8xbf16>
    %cst_20 = arith.constant dense<0.000000e+00> : vector<8x8xf32>
    %64 = tpu.matmul %61, %62, %cst_20 {dimension_numbers = #tpu.dot_dimension_numbers<[1], [1], [0], [0], [0, 0, 1, 0], [], []>} : vector<8x8xbf16>, vector<8x8xbf16>, vector<8x8xf32> -> vector<8x8xf32>
    %cst_21 = arith.constant 0xFF800000 : f32
    %65 = vector.broadcast %cst_21 : f32 to vector<8x8xf32>
    %66 = arith.select %22, %64, %65 : vector<8x8xi1>, vector<8x8xf32>
    %cst_22 = arith.constant dense<0xFF800000> : vector<8xf32>
    %67 = vector.multi_reduction <maximumf>, %66, %cst_22 [1] : vector<8x8xf32> to vector<8xf32>
    %68 = vector.shape_cast %67 : vector<8xf32> to vector<8x1xf32>
    %69 = vector.broadcast %68 : vector<8x1xf32> to vector<8x8xf32>
    %70 = arith.subf %66, %69 : vector<8x8xf32>
    %71 = math.exp %70 : vector<8x8xf32>
    %cst_23 = arith.constant dense<0.000000e+00> : vector<8xf32>
    %72 = vector.multi_reduction <add>, %71, %cst_23 [1] : vector<8x8xf32> to vector<8xf32>
    %73 = vector.shape_cast %72 : vector<8xf32> to vector<8x1xf32>
    %74 = arith.truncf %71 : vector<8x8xf32> to vector<8x8xbf16>
    %cst_24 = arith.constant dense<0.000000e+00> : vector<8x8xf32>
    %75 = tpu.matmul %74, %63, %cst_24 {dimension_numbers = #tpu.dot_dimension_numbers<[1], [0], [0], [1], [0, 0, 1, 1], [], []>} : vector<8x8xbf16>, vector<8x8xbf16>, vector<8x8xf32> -> vector<8x8xf32>
    %76 = tpu.reciprocal %73 {approx = true} : vector<8x1xf32> -> vector<8x1xf32>
    %77 = vector.broadcast %76 : vector<8x1xf32> to vector<8x8xf32>
    %78 = arith.mulf %75, %77 : vector<8x8xf32>
    %79 = arith.truncf %78 : vector<8x8xf32> to vector<8x8xbf16>
    %80 = vector.extract_strided_slice %13 {offsets = [0, 24], sizes = [8, 8], strides = [1, 1]} : vector<8x32xbf16> to vector<8x8xbf16>
    %81 = vector.extract_strided_slice %15 {offsets = [0, 24], sizes = [8, 8], strides = [1, 1]} : vector<8x32xbf16> to vector<8x8xbf16>
    %82 = vector.extract_strided_slice %16 {offsets = [0, 24], sizes = [8, 8], strides = [1, 1]} : vector<8x32xbf16> to vector<8x8xbf16>
    %cst_25 = arith.constant dense<0.000000e+00> : vector<8x8xf32>
    %83 = tpu.matmul %80, %81, %cst_25 {dimension_numbers = #tpu.dot_dimension_numbers<[1], [1], [0], [0], [0, 0, 1, 0], [], []>} : vector<8x8xbf16>, vector<8x8xbf16>, vector<8x8xf32> -> vector<8x8xf32>
    %cst_26 = arith.constant 0xFF800000 : f32
    %84 = vector.broadcast %cst_26 : f32 to vector<8x8xf32>
    %85 = arith.select %22, %83, %84 : vector<8x8xi1>, vector<8x8xf32>
    %cst_27 = arith.constant dense<0xFF800000> : vector<8xf32>
    %86 = vector.multi_reduction <maximumf>, %85, %cst_27 [1] : vector<8x8xf32> to vector<8xf32>
    %87 = vector.shape_cast %86 : vector<8xf32> to vector<8x1xf32>
    %88 = vector.broadcast %87 : vector<8x1xf32> to vector<8x8xf32>
    %89 = arith.subf %85, %88 : vector<8x8xf32>
    %90 = math.exp %89 : vector<8x8xf32>
    %cst_28 = arith.constant dense<0.000000e+00> : vector<8xf32>
    %91 = vector.multi_reduction <add>, %90, %cst_28 [1] : vector<8x8xf32> to vector<8xf32>
    %92 = vector.shape_cast %91 : vector<8xf32> to vector<8x1xf32>
    %93 = arith.truncf %90 : vector<8x8xf32> to vector<8x8xbf16>
    %cst_29 = arith.constant dense<0.000000e+00> : vector<8x8xf32>
    %94 = tpu.matmul %93, %82, %cst_29 {dimension_numbers = #tpu.dot_dimension_numbers<[1], [0], [0], [1], [0, 0, 1, 1], [], []>} : vector<8x8xbf16>, vector<8x8xbf16>, vector<8x8xf32> -> vector<8x8xf32>
    %95 = tpu.reciprocal %92 {approx = true} : vector<8x1xf32> -> vector<8x1xf32>
    %96 = vector.broadcast %95 : vector<8x1xf32> to vector<8x8xf32>
    %97 = arith.mulf %94, %96 : vector<8x8xf32>
    %98 = arith.truncf %97 : vector<8x8xf32> to vector<8x8xbf16>
    %99 = tpu.concatenate %41, %60, %79, %98 in 1 : vector<8x8xbf16>, vector<8x8xbf16>, vector<8x8xbf16>, vector<8x8xbf16> -> vector<8x32xbf16>
    %c0_30 = arith.constant 0 : index
    %c0_31 = arith.constant 0 : index
    %100 = vector.load %arg8[%c0_30, %c0_31] : memref<32x32xbf16, #tpu.memory_space<vmem>>, vector<32x32xbf16>
    %cst_32 = arith.constant dense<0.000000e+00> : vector<8x32xf32>
    %101 = tpu.matmul %99, %100, %cst_32 {dimension_numbers = #tpu.dot_dimension_numbers<[1], [0], [0], [1], [0, 0, 1, 1], [], []>} : vector<8x32xbf16>, vector<32x32xbf16>, vector<8x32xf32> -> vector<8x32xf32>
    %c0_33 = arith.constant 0 : index
    %c0_34 = arith.constant 0 : index
    %102 = vector.load %arg9[%c0_33, %c0_34] : memref<1x32xf32, #tpu.memory_space<vmem>>, vector<1x32xf32>
    %103 = vector.broadcast %102 : vector<1x32xf32> to vector<8x32xf32>
    %104 = arith.addf %101, %103 : vector<8x32xf32>
    %105 = arith.addf %1, %104 : vector<8x32xf32>
    %106 = arith.truncf %105 : vector<8x32xf32> to vector<8x32xbf16>
    %c0_35 = arith.constant 0 : index
    %c0_36 = arith.constant 0 : index
    %107 = vector.load %arg10[%c0_35, %c0_36] : memref<32x128xbf16, #tpu.memory_space<vmem>>, vector<32x128xbf16>
    %cst_37 = arith.constant dense<0.000000e+00> : vector<8x128xf32>
    %108 = tpu.matmul %106, %107, %cst_37 {dimension_numbers = #tpu.dot_dimension_numbers<[1], [0], [0], [1], [0, 0, 1, 1], [], []>} : vector<8x32xbf16>, vector<32x128xbf16>, vector<8x128xf32> -> vector<8x128xf32>
    %c0_38 = arith.constant 0 : index
    %c0_39 = arith.constant 0 : index
    %109 = vector.load %arg11[%c0_38, %c0_39] : memref<1x128xf32, #tpu.memory_space<vmem>>, vector<1x128xf32>
    %110 = vector.broadcast %109 : vector<1x128xf32> to vector<8x128xf32>
    %111 = arith.addf %108, %110 : vector<8x128xf32>
    %cst_40 = arith.constant 0.000000e+00 : f32
    %112 = vector.broadcast %cst_40 : f32 to vector<8x128xf32>
    %113 = arith.maximumf %111, %112 : vector<8x128xf32>
    %114 = arith.truncf %113 : vector<8x128xf32> to vector<8x128xbf16>
    %c0_41 = arith.constant 0 : index
    %c0_42 = arith.constant 0 : index
    %115 = vector.load %arg12[%c0_41, %c0_42] : memref<128x32xbf16, #tpu.memory_space<vmem>>, vector<128x32xbf16>
    %cst_43 = arith.constant dense<0.000000e+00> : vector<8x32xf32>
    %116 = tpu.matmul %114, %115, %cst_43 {dimension_numbers = #tpu.dot_dimension_numbers<[1], [0], [0], [1], [0, 0, 1, 1], [], []>} : vector<8x128xbf16>, vector<128x32xbf16>, vector<8x32xf32> -> vector<8x32xf32>
    %c0_44 = arith.constant 0 : index
    %c0_45 = arith.constant 0 : index
    %117 = vector.load %arg13[%c0_44, %c0_45] : memref<1x32xf32, #tpu.memory_space<vmem>>, vector<1x32xf32>
    %118 = vector.broadcast %117 : vector<1x32xf32> to vector<8x32xf32>
    %119 = arith.addf %116, %118 : vector<8x32xf32>
    %120 = arith.addf %105, %119 : vector<8x32xf32>
    %c0_46 = arith.constant 0 : index
    %c0_47 = arith.constant 0 : index
    %c0_48 = arith.constant 0 : index
    %121 = vector.load %arg14[%c0_46, %c0_47, %c0_48] : memref<1x8x32xf32, #tpu.memory_space<vmem>>, vector<1x8x32xf32>
    %122 = vector.shape_cast %121 : vector<1x8x32xf32> to vector<8x32xf32>
    %123 = vector.shape_cast %120 : vector<8x32xf32> to vector<1x8x32xf32>
    tpu.vector_store %arg14[%c0_46, %c0_47, %c0_48], %123 {strides = array<i32>} : memref<1x8x32xf32, #tpu.memory_space<vmem>>, vector<1x8x32xf32>,
    return
  }
  func.func @transform_0(%arg0: i32, %arg1: i32) -> (i32, i32, i32) {
    %c0_i32 = arith.constant 0 : i32
    %c0_i32_0 = arith.constant 0 : i32
    return %arg0, %arg1, %c0_i32 : i32, i32, i32
  }
  func.func @transform_1(%arg0: i32, %arg1: i32) -> (i32, i32, i32) {
    %c0_i32 = arith.constant 0 : i32
    %c0_i32_0 = arith.constant 0 : i32
    %c0_i32_1 = arith.constant 0 : i32
    return %arg0, %c0_i32, %c0_i32_0 : i32, i32, i32
  }
  func.func @transform_2(%arg0: i32, %arg1: i32) -> (i32, i32) {
    %c0_i32 = arith.constant 0 : i32
    %c0_i32_0 = arith.constant 0 : i32
    %c0_i32_1 = arith.constant 0 : i32
    return %c0_i32, %c0_i32_0 : i32, i32
  }
  func.func @transform_3(%arg0: i32, %arg1: i32) -> (i32, i32) {
    %c0_i32 = arith.constant 0 : i32
    %c0_i32_0 = arith.constant 0 : i32
    %c0_i32_1 = arith.constant 0 : i32
    return %c0_i32, %c0_i32_0 : i32, i32
  }
  func.func @transform_4(%arg0: i32, %arg1: i32) -> (i32, i32) {
    %c0_i32 = arith.constant 0 : i32
    %c0_i32_0 = arith.constant 0 : i32
    %c0_i32_1 = arith.constant 0 : i32
    return %c0_i32, %c0_i32_0 : i32, i32
  }
  func.func @transform_5(%arg0: i32, %arg1: i32) -> (i32, i32) {
    %c0_i32 = arith.constant 0 : i32
    %c0_i32_0 = arith.constant 0 : i32
    %c0_i32_1 = arith.constant 0 : i32
    return %c0_i32, %c0_i32_0 : i32, i32
  }
  func.func @transform_6(%arg0: i32, %arg1: i32) -> (i32, i32) {
    %c0_i32 = arith.constant 0 : i32
    %c0_i32_0 = arith.constant 0 : i32
    %c0_i32_1 = arith.constant 0 : i32
    return %c0_i32, %c0_i32_0 : i32, i32
  }
  func.func @transform_7(%arg0: i32, %arg1: i32) -> (i32, i32) {
    %c0_i32 = arith.constant 0 : i32
    %c0_i32_0 = arith.constant 0 : i32
    %c0_i32_1 = arith.constant 0 : i32
    return %c0_i32, %c0_i32_0 : i32, i32
  }
  func.func @transform_8(%arg0: i32, %arg1: i32) -> (i32, i32) {
    %c0_i32 = arith.constant 0 : i32
    %c0_i32_0 = arith.constant 0 : i32
    %c0_i32_1 = arith.constant 0 : i32
    return %c0_i32, %c0_i32_0 : i32, i32
  }
  func.func @transform_9(%arg0: i32, %arg1: i32) -> (i32, i32) {
    %c0_i32 = arith.constant 0 : i32
    %c0_i32_0 = arith.constant 0 : i32
    %c0_i32_1 = arith.constant 0 : i32
    return %c0_i32, %c0_i32_0 : i32, i32
  }
  func.func @transform_10(%arg0: i32, %arg1: i32) -> (i32, i32) {
    %c0_i32 = arith.constant 0 : i32
    %c0_i32_0 = arith.constant 0 : i32
    %c0_i32_1 = arith.constant 0 : i32
    return %c0_i32, %c0_i32_0 : i32, i32
  }
  func.func @transform_11(%arg0: i32, %arg1: i32) -> (i32, i32) {
    %c0_i32 = arith.constant 0 : i32
    %c0_i32_0 = arith.constant 0 : i32
    %c0_i32_1 = arith.constant 0 : i32
    return %c0_i32, %c0_i32_0 : i32, i32
  }
  func.func @transform_12(%arg0: i32, %arg1: i32) -> (i32, i32, i32) {
    %c0_i32 = arith.constant 0 : i32
    %c0_i32_0 = arith.constant 0 : i32
    return %arg0, %arg1, %c0_i32 : i32, i32, i32
  }
}

</mosaic_0001>

<llo_original>
// kernel: fwd.1
$region0: #{fwd.1}
  #allocation0 [shape = 'u32[]', space=smem, size = 0x4, offset = 0x4, fixed_abs, tag = 'smem constant byte address 0x4 - core index']
  #allocation1 [shape = 'u32[144,128]{1,0:T(1,128)}', space=vmem, size = 0x12000, scoped, tag = 'internal scratch']
  #allocation2 [shape = 'bf16[8,64]{1,0:T(8,128)(2,1)}', space=vmem, size = 0x800, scoped, tag = 'scratch operand']
  %s0 = inlined_call_operand.vmem [shape: f32[2,8,32], index: 0, kind: input, shape index: {}]
  %s1 = inlined_call_operand.vmem [shape: bf16[2,8,32], index: 1, kind: input, shape index: {}]
  %s2 = inlined_call_operand.vmem [shape: bf16[32,32], index: 2, kind: input, shape index: {}]
  %s3 = inlined_call_operand.vmem [shape: f32[1,32], index: 3, kind: input, shape index: {}]
  %s4 = inlined_call_operand.vmem [shape: bf16[32,64], index: 4, kind: input, shape index: {}]
  %s5 = inlined_call_operand.vmem [shape: f32[1,64], index: 5, kind: input, shape index: {}]
  %s6 = inlined_call_operand.vmem [shape: bf16[32,32], index: 6, kind: input, shape index: {}]
  %s7 = inlined_call_operand.vmem [shape: f32[1,32], index: 7, kind: input, shape index: {}]
  %s8 = inlined_call_operand.vmem [shape: bf16[32,128], index: 8, kind: input, shape index: {}]
  %s9 = inlined_call_operand.vmem [shape: f32[1,128], index: 9, kind: input, shape index: {}]
  %s10 = inlined_call_operand.vmem [shape: bf16[128,32], index: 10, kind: input, shape index: {}]
  %s11 = inlined_call_operand.vmem [shape: f32[1,32], index: 11, kind: input, shape index: {}]
  %s12 = inlined_call_operand.hbm [shape: f32[2,8,32], index: 12, kind: output, shape index: {}]
  %s13 = sld [smem:[#allocation0]]
  $region85: #{fwd.1} parent=0
    _
  %s15 = ssub.s32 1, %s13
  %s16 = scalar_select 0, %s15, %s13
  $region1: #{fwd.1} parent=0
    #allocation3 [shape = 'u8[8192]{0}', space=vmem, size = 0x2000, scoped, tag = 'output window, operand 0']
    #allocation4 [shape = 's32[2]{0}', space=sflag, size = 0x8, scoped, tag = 'scoped memory for fwd.1']
    %17 = vsyncpa [#allocation4], 0
    %s18 = scalar_lea.sflag [#allocation4], 1
    %19 = vsyncpa %s18, 0
    loop: start=0, step=1, limit=4
    $region2: #{fwd.1} parent=1 // loop_pre_header
      _
    $region3: #{fwd.1} parent=1 // loop_header
      %s21 = sphi 0, %s25
      %p22 = scmp.ge.s32.totalorder %s21, 4
      %s28 = sphi 0, %s40
      %s29 = sphi 0, %s36
      %s30 = sphi 0, %s28
      %s31 = sphi 0, %s29
      %s32 = sphi 0, %s30
      %s33 = sphi 0, %s31
      %s45 = sphi 0, %s47
      %s48 = sphi 0, %s45
      %s49 = sphi 0, %s48
      %s65 = sphi 0, %s49
      %s71 = sphi 0, %s73
      %s74 = sphi 0, %s71
      %s75 = sphi 0, %s74
      %s91 = sphi 0, %s75
      %s95 = sphi 0, %s95
      %s97 = sphi 0, %s95
      %s98 = sphi 0, %s97
      %s112 = sphi 0, %s98
      %s116 = sphi 0, %s116
      %s118 = sphi 0, %s116
      %s119 = sphi 0, %s118
      %s133 = sphi 0, %s119
      %s137 = sphi 0, %s137
      %s139 = sphi 0, %s137
      %s140 = sphi 0, %s139
      %s154 = sphi 0, %s140
      %s158 = sphi 0, %s158
      %s160 = sphi 0, %s158
      %s161 = sphi 0, %s160
      %s175 = sphi 0, %s161
      %s179 = sphi 0, %s179
      %s181 = sphi 0, %s179
      %s182 = sphi 0, %s181
      %s196 = sphi 0, %s182
      %s200 = sphi 0, %s200
      %s202 = sphi 0, %s200
      %s203 = sphi 0, %s202
      %s217 = sphi 0, %s203
      %s221 = sphi 0, %s221
      %s223 = sphi 0, %s221
      %s224 = sphi 0, %s223
      %s238 = sphi 0, %s224
      %s242 = sphi 0, %s242
      %s244 = sphi 0, %s242
      %s245 = sphi 0, %s244
      %s259 = sphi 0, %s245
      %s263 = sphi 0, %s263
      %s265 = sphi 0, %s263
      %s266 = sphi 0, %s265
      %s280 = sphi 0, %s266
      %s284 = sphi 0, %s284
      %s286 = sphi 0, %s284
      %s287 = sphi 0, %s286
      %s301 = sphi 0, %s287
      %s309 = sphi 0, %s311
      %s312 = sphi 0, %s309
      %s313 = sphi 0, %s312
      %s329 = sphi 0, %s313
    $region4: #{fwd.1} parent=1 // loop_header_branch
      %24 = sbr.rel (%p22) target = $region8
    $region5: #{fwd.1} parent=1 // loop_body
      %s26 = ssub.s32 %s21, 1
      %s27 = ssub.s32 %s21, 2
      %s34 = sadd.s32 1, %s29
      %p35 = scmp.ge.s32.totalorder %s34, 1
      %s36 = scalar_select %p35, 0, %s34
      %s37 = sadd.s32 1, %s28
      %s38 = scalar_select %p35, %s37, %s28
      %p39 = scmp.ge.s32.totalorder %s38, 2
      %s40 = scalar_select %p39, 0, %s38
      %s41 = ssub.s32 %s28, %s40
      %s42 = ssub.s32 %s29, %s36
      %s43 = sor.u32 %s41, %s42
      %p44 = scmp.eq.s32.totalorder %s43, 0
      %s46 = sadd.s32 %s45, 1
      %s47 = scalar_select %p44, %s45, %s46
      %p50 = pneg %p44
      %p51 = scmp.eq.s32.totalorder %s21, 1
      %p52 = por %p50, %p51
      %p53 = scmp.ne.s32.totalorder %s45, %s48
      %p54 = scmp.eq.s32.totalorder %s21, 0
      %p55 = por %p53, %p54
      %p56 = scmp.ne.s32.totalorder %s45, %s48
      %p57 = scmp.eq.s32.totalorder %s26, 1
      %p58 = por %p56, %p57
      %p59 = scmp.ne.s32.totalorder %s48, %s49
      %p60 = scmp.eq.s32.totalorder %s26, 0
      %p61 = por %p59, %p60
      %p62 = scmp.ne.s32.totalorder %s48, %s49
      %p63 = scmp.eq.s32.totalorder %s27, 1
      %p64 = por %p62, %p63
      %p66 = scmp.ne.s32.totalorder %s49, %s65
      %p67 = scmp.eq.s32.totalorder %s27, 0
      %p68 = por %p66, %p67
      %s69 = ssub.s32 %s28, %s40
      %p70 = scmp.eq.s32.totalorder %s69, 0
      %s72 = sadd.s32 %s71, 1
      %s73 = scalar_select %p70, %s71, %s72
      %p76 = pneg %p70
      %p77 = scmp.eq.s32.totalorder %s21, 1
      %p78 = por %p76, %p77
      %p79 = scmp.ne.s32.totalorder %s71, %s74
      %p80 = scmp.eq.s32.totalorder %s21, 0
      %p81 = por %p79, %p80
      %p82 = scmp.ne.s32.totalorder %s71, %s74
      %p83 = scmp.eq.s32.totalorder %s26, 1
      %p84 = por %p82, %p83
      %p85 = scmp.ne.s32.totalorder %s74, %s75
      %p86 = scmp.eq.s32.totalorder %s26, 0
      %p87 = por %p85, %p86
      %p88 = scmp.ne.s32.totalorder %s74, %s75
      %p89 = scmp.eq.s32.totalorder %s27, 1
      %p90 = por %p88, %p89
      %p92 = scmp.ne.s32.totalorder %s75, %s91
      %p93 = scmp.eq.s32.totalorder %s27, 0
      %p94 = por %p92, %p93
      %s96 = sadd.s32 %s95, 1
      %p99 = scmp.eq.s32.totalorder %s21, 1
      %p100 = scmp.ne.s32.totalorder %s95, %s97
      %p101 = scmp.eq.s32.totalorder %s21, 0
      %p102 = por %p100, %p101
      %p103 = scmp.ne.s32.totalorder %s95, %s97
      %p104 = scmp.eq.s32.totalorder %s26, 1
      %p105 = por %p103, %p104
      %p106 = scmp.ne.s32.totalorder %s97, %s98
      %p107 = scmp.eq.s32.totalorder %s26, 0
      %p108 = por %p106, %p107
      %p109 = scmp.ne.s32.totalorder %s97, %s98
      %p110 = scmp.eq.s32.totalorder %s27, 1
      %p111 = por %p109, %p110
      %p113 = scmp.ne.s32.totalorder %s98, %s112
      %p114 = scmp.eq.s32.totalorder %s27, 0
      %p115 = por %p113, %p114
      %s117 = sadd.s32 %s116, 1
      %p120 = scmp.eq.s32.totalorder %s21, 1
      %p121 = scmp.ne.s32.totalorder %s116, %s118
      %p122 = scmp.eq.s32.totalorder %s21, 0
      %p123 = por %p121, %p122
      %p124 = scmp.ne.s32.totalorder %s116, %s118
      %p125 = scmp.eq.s32.totalorder %s26, 1
      %p126 = por %p124, %p125
      %p127 = scmp.ne.s32.totalorder %s118, %s119
      %p128 = scmp.eq.s32.totalorder %s26, 0
      %p129 = por %p127, %p128
      %p130 = scmp.ne.s32.totalorder %s118, %s119
      %p131 = scmp.eq.s32.totalorder %s27, 1
      %p132 = por %p130, %p131
      %p134 = scmp.ne.s32.totalorder %s119, %s133
      %p135 = scmp.eq.s32.totalorder %s27, 0
      %p136 = por %p134, %p135
      %s138 = sadd.s32 %s137, 1
      %p141 = scmp.eq.s32.totalorder %s21, 1
      %p142 = scmp.ne.s32.totalorder %s137, %s139
      %p143 = scmp.eq.s32.totalorder %s21, 0
      %p144 = por %p142, %p143
      %p145 = scmp.ne.s32.totalorder %s137, %s139
      %p146 = scmp.eq.s32.totalorder %s26, 1
      %p147 = por %p145, %p146
      %p148 = scmp.ne.s32.totalorder %s139, %s140
      %p149 = scmp.eq.s32.totalorder %s26, 0
      %p150 = por %p148, %p149
      %p151 = scmp.ne.s32.totalorder %s139, %s140
      %p152 = scmp.eq.s32.totalorder %s27, 1
      %p153 = por %p151, %p152
      %p155 = scmp.ne.s32.totalorder %s140, %s154
      %p156 = scmp.eq.s32.totalorder %s27, 0
      %p157 = por %p155, %p156
      %s159 = sadd.s32 %s158, 1
      %p162 = scmp.eq.s32.totalorder %s21, 1
      %p163 = scmp.ne.s32.totalorder %s158, %s160
      %p164 = scmp.eq.s32.totalorder %s21, 0
      %p165 = por %p163, %p164
      %p166 = scmp.ne.s32.totalorder %s158, %s160
      %p167 = scmp.eq.s32.totalorder %s26, 1
      %p168 = por %p166, %p167
      %p169 = scmp.ne.s32.totalorder %s160, %s161
      %p170 = scmp.eq.s32.totalorder %s26, 0
      %p171 = por %p169, %p170
      %p172 = scmp.ne.s32.totalorder %s160, %s161
      %p173 = scmp.eq.s32.totalorder %s27, 1
      %p174 = por %p172, %p173
      %p176 = scmp.ne.s32.totalorder %s161, %s175
      %p177 = scmp.eq.s32.totalorder %s27, 0
      %p178 = por %p176, %p177
      %s180 = sadd.s32 %s179, 1
      %p183 = scmp.eq.s32.totalorder %s21, 1
      %p184 = scmp.ne.s32.totalorder %s179, %s181
      %p185 = scmp.eq.s32.totalorder %s21, 0
      %p186 = por %p184, %p185
      %p187 = scmp.ne.s32.totalorder %s179, %s181
      %p188 = scmp.eq.s32.totalorder %s26, 1
      %p189 = por %p187, %p188
      %p190 = scmp.ne.s32.totalorder %s181, %s182
      %p191 = scmp.eq.s32.totalorder %s26, 0
      %p192 = por %p190, %p191
      %p193 = scmp.ne.s32.totalorder %s181, %s182
      %p194 = scmp.eq.s32.totalorder %s27, 1
      %p195 = por %p193, %p194
      %p197 = scmp.ne.s32.totalorder %s182, %s196
      %p198 = scmp.eq.s32.totalorder %s27, 0
      %p199 = por %p197, %p198
      %s201 = sadd.s32 %s200, 1
      %p204 = scmp.eq.s32.totalorder %s21, 1
      %p205 = scmp.ne.s32.totalorder %s200, %s202
      %p206 = scmp.eq.s32.totalorder %s21, 0
      %p207 = por %p205, %p206
      %p208 = scmp.ne.s32.totalorder %s200, %s202
      %p209 = scmp.eq.s32.totalorder %s26, 1
      %p210 = por %p208, %p209
      %p211 = scmp.ne.s32.totalorder %s202, %s203
      %p212 = scmp.eq.s32.totalorder %s26, 0
      %p213 = por %p211, %p212
      %p214 = scmp.ne.s32.totalorder %s202, %s203
      %p215 = scmp.eq.s32.totalorder %s27, 1
      %p216 = por %p214, %p215
      %p218 = scmp.ne.s32.totalorder %s203, %s217
      %p219 = scmp.eq.s32.totalorder %s27, 0
      %p220 = por %p218, %p219
      %s222 = sadd.s32 %s221, 1
      %p225 = scmp.eq.s32.totalorder %s21, 1
      %p226 = scmp.ne.s32.totalorder %s221, %s223
      %p227 = scmp.eq.s32.totalorder %s21, 0
      %p228 = por %p226, %p227
      %p229 = scmp.ne.s32.totalorder %s221, %s223
      %p230 = scmp.eq.s32.totalorder %s26, 1
      %p231 = por %p229, %p230
      %p232 = scmp.ne.s32.totalorder %s223, %s224
      %p233 = scmp.eq.s32.totalorder %s26, 0
      %p234 = por %p232, %p233
      %p235 = scmp.ne.s32.totalorder %s223, %s224
      %p236 = scmp.eq.s32.totalorder %s27, 1
      %p237 = por %p235, %p236
      %p239 = scmp.ne.s32.totalorder %s224, %s238
      %p240 = scmp.eq.s32.totalorder %s27, 0
      %p241 = por %p239, %p240
      %s243 = sadd.s32 %s242, 1
      %p246 = scmp.eq.s32.totalorder %s21, 1
      %p247 = scmp.ne.s32.totalorder %s242, %s244
      %p248 = scmp.eq.s32.totalorder %s21, 0
      %p249 = por %p247, %p248
      %p250 = scmp.ne.s32.totalorder %s242, %s244
      %p251 = scmp.eq.s32.totalorder %s26, 1
      %p252 = por %p250, %p251
      %p253 = scmp.ne.s32.totalorder %s244, %s245
      %p254 = scmp.eq.s32.totalorder %s26, 0
      %p255 = por %p253, %p254
      %p256 = scmp.ne.s32.totalorder %s244, %s245
      %p257 = scmp.eq.s32.totalorder %s27, 1
      %p258 = por %p256, %p257
      %p260 = scmp.ne.s32.totalorder %s245, %s259
      %p261 = scmp.eq.s32.totalorder %s27, 0
      %p262 = por %p260, %p261
      %s264 = sadd.s32 %s263, 1
      %p267 = scmp.eq.s32.totalorder %s21, 1
      %p268 = scmp.ne.s32.totalorder %s263, %s265
      %p269 = scmp.eq.s32.totalorder %s21, 0
      %p270 = por %p268, %p269
      %p271 = scmp.ne.s32.totalorder %s263, %s265
      %p272 = scmp.eq.s32.totalorder %s26, 1
      %p273 = por %p271, %p272
      %p274 = scmp.ne.s32.totalorder %s265, %s266
      %p275 = scmp.eq.s32.totalorder %s26, 0
      %p276 = por %p274, %p275
      %p277 = scmp.ne.s32.totalorder %s265, %s266
      %p278 = scmp.eq.s32.totalorder %s27, 1
      %p279 = por %p277, %p278
      %p281 = scmp.ne.s32.totalorder %s266, %s280
      %p282 = scmp.eq.s32.totalorder %s27, 0
      %p283 = por %p281, %p282
      %s285 = sadd.s32 %s284, 1
      %p288 = scmp.eq.s32.totalorder %s21, 1
      %p289 = scmp.ne.s32.totalorder %s284, %s286
      %p290 = scmp.eq.s32.totalorder %s21, 0
      %p291 = por %p289, %p290
      %p292 = scmp.ne.s32.totalorder %s284, %s286
      %p293 = scmp.eq.s32.totalorder %s26, 1
      %p294 = por %p292, %p293
      %p295 = scmp.ne.s32.totalorder %s286, %s287
      %p296 = scmp.eq.s32.totalorder %s26, 0
      %p297 = por %p295, %p296
      %p298 = scmp.ne.s32.totalorder %s286, %s287
      %p299 = scmp.eq.s32.totalorder %s27, 1
      %p300 = por %p298, %p299
      %p302 = scmp.ne.s32.totalorder %s287, %s301
      %p303 = scmp.eq.s32.totalorder %s27, 0
      %p304 = por %p302, %p303
      %s305 = ssub.s32 %s28, %s40
      %s306 = ssub.s32 %s29, %s36
      %s307 = sor.u32 %s305, %s306
      %p308 = scmp.eq.s32.totalorder %s307, 0
      %s310 = sadd.s32 %s309, 1
      %s311 = scalar_select %p308, %s309, %s310
      %p314 = pneg %p308
      %p315 = scmp.eq.s32.totalorder %s21, 1
      %p316 = por %p314, %p315
      %p317 = scmp.ne.s32.totalorder %s309, %s312
      %p318 = scmp.eq.s32.totalorder %s21, 0
      %p319 = por %p317, %p318
      %p320 = scmp.ne.s32.totalorder %s309, %s312
      %p321 = scmp.eq.s32.totalorder %s26, 1
      %p322 = por %p320, %p321
      %p323 = scmp.ne.s32.totalorder %s312, %s313
      %p324 = scmp.eq.s32.totalorder %s26, 0
      %p325 = por %p323, %p324
      %p326 = scmp.ne.s32.totalorder %s312, %s313
      %p327 = scmp.eq.s32.totalorder %s27, 1
      %p328 = por %p326, %p327
      %p330 = scmp.ne.s32.totalorder %s313, %s329
      %p331 = scmp.eq.s32.totalorder %s27, 0
      %p332 = por %p330, %p331
      %p333 = scmp.le.s32.totalorder 1, %s21
      %p334 = scmp.lt.s32.totalorder %s21, 3
      %p335 = pnand %p333, %p334
      %p336 = pneg %p335
      // Predicated region
      $region9: #{fwd.1} parent=5 // pred_check
        _
      $region10: #{fwd.1} parent=5 // pred_check_branch
        %338 = sbr.rel (%p335) target = $region12
      $region11: #{fwd.1} parent=5 // pred_region
        %s339 = ssub.s32 %s21, 1
        // Predicated region
        $region13: #{fwd.1} parent=11 // pred_check
          %p340 = pneg %p108
        $region14: #{fwd.1} parent=11 // pred_check_branch
          %342 = sbr.rel (%p340) target = $region16
        $region15: #{fwd.1} parent=11 // pred_region
          _
        $region16: #{fwd.1} parent=11 // pred_fallthru
          _
        // Predicated region
        $region17: #{fwd.1} parent=11 // pred_check
          %p343 = pneg %p129
        $region18: #{fwd.1} parent=11 // pred_check_branch
          %345 = sbr.rel (%p343) target = $region20
        $region19: #{fwd.1} parent=11 // pred_region
          _
        $region20: #{fwd.1} parent=11 // pred_fallthru
          _
        // Predicated region
        $region21: #{fwd.1} parent=11 // pred_check
          %p346 = pneg %p150
        $region22: #{fwd.1} parent=11 // pred_check_branch
          %348 = sbr.rel (%p346) target = $region24
        $region23: #{fwd.1} parent=11 // pred_region
          _
        $region24: #{fwd.1} parent=11 // pred_fallthru
          _
        // Predicated region
        $region25: #{fwd.1} parent=11 // pred_check
          %p349 = pneg %p171
        $region26: #{fwd.1} parent=11 // pred_check_branch
          %351 = sbr.rel (%p349) target = $region28
        $region27: #{fwd.1} parent=11 // pred_region
          _
        $region28: #{fwd.1} parent=11 // pred_fallthru
          _
        // Predicated region
        $region29: #{fwd.1} parent=11 // pred_check
          %p352 = pneg %p192
        $region30: #{fwd.1} parent=11 // pred_check_branch
          %354 = sbr.rel (%p352) target = $region32
        $region31: #{fwd.1} parent=11 // pred_region
          _
        $region32: #{fwd.1} parent=11 // pred_fallthru
          _
        // Predicated region
        $region33: #{fwd.1} parent=11 // pred_check
          %p355 = pneg %p213
        $region34: #{fwd.1} parent=11 // pred_check_branch
          %357 = sbr.rel (%p355) target = $region36
        $region35: #{fwd.1} parent=11 // pred_region
          _
        $region36: #{fwd.1} parent=11 // pred_fallthru
          _
        // Predicated region
        $region37: #{fwd.1} parent=11 // pred_check
          %p358 = pneg %p234
        $region38: #{fwd.1} parent=11 // pred_check_branch
          %360 = sbr.rel (%p358) target = $region40
        $region39: #{fwd.1} parent=11 // pred_region
          _
        $region40: #{fwd.1} parent=11 // pred_fallthru
          _
        // Predicated region
        $region41: #{fwd.1} parent=11 // pred_check
          %p361 = pneg %p255
        $region42: #{fwd.1} parent=11 // pred_check_branch
          %363 = sbr.rel (%p361) target = $region44
        $region43: #{fwd.1} parent=11 // pred_region
          _
        $region44: #{fwd.1} parent=11 // pred_fallthru
          _
        // Predicated region
        $region45: #{fwd.1} parent=11 // pred_check
          %p364 = pneg %p276
        $region46: #{fwd.1} parent=11 // pred_check_branch
          %366 = sbr.rel (%p364) target = $region48
        $region47: #{fwd.1} parent=11 // pred_region
          _
        $region48: #{fwd.1} parent=11 // pred_fallthru
          _
        // Predicated region
        $region49: #{fwd.1} parent=11 // pred_check
          %p367 = pneg %p297
        $region50: #{fwd.1} parent=11 // pred_check_branch
          %369 = sbr.rel (%p367) target = $region52
        $region51: #{fwd.1} parent=11 // pred_region
          _
        $region52: #{fwd.1} parent=11 // pred_fallthru
          _
      $region12: #{fwd.1} parent=5 // pred_fallthru
        _
      %p370 = scmp.lt.s32.totalorder %s21, 2
      // Predicated region
      $region53: #{fwd.1} parent=5 // pred_check
        %p371 = pneg %p370
      $region54: #{fwd.1} parent=5 // pred_check_branch
        %373 = sbr.rel (%p371) target = $region56
      $region55: #{fwd.1} parent=5 // pred_region
        // Predicated region
        $region57: #{fwd.1} parent=55 // pred_check
          %p374 = pneg %p55
        $region58: #{fwd.1} parent=55 // pred_check_branch
          %376 = sbr.rel (%p374) target = $region60
        $region59: #{fwd.1} parent=55 // pred_region
          %p377 = scmp.lt.s32.totalorder %s28, 1
          %s378 = scalar_select %p377, %s28, 1
          %p379 = scmp.lt.s32.totalorder %s29, 0
          %s380 = scalar_select %p379, %s29, 0
          %s381 = sadd.s32 %s380, %s378
          %s382 = smul.addr %s381, 8
          %s383 = scalar_lea.vmem %s0, %s382
        $region60: #{fwd.1} parent=55 // pred_fallthru
          _
        // Predicated region
        $region61: #{fwd.1} parent=55 // pred_check
          %p384 = pneg %p81
        $region62: #{fwd.1} parent=55 // pred_check_branch
          %386 = sbr.rel (%p384) target = $region64
        $region63: #{fwd.1} parent=55 // pred_region
          %p387 = scmp.lt.s32.totalorder %s28, 1
          %s388 = scalar_select %p387, %s28, 1
          %s389 = smul.addr %s388, 4
          %s390 = scalar_lea.vmem %s1, %s389
        $region64: #{fwd.1} parent=55 // pred_fallthru
          _
      $region56: #{fwd.1} parent=5 // pred_fallthru
        _
      %p391 = scmp.le.s32.totalorder 1, %s21
      %p392 = scmp.lt.s32.totalorder %s21, 3
      %p393 = pnand %p391, %p392
      %p394 = pneg %p393
      // Predicated region
      $region65: #{fwd.1} parent=5 // pred_check
        _
      $region66: #{fwd.1} parent=5 // pred_check_branch
        %396 = sbr.rel (%p393) target = $region68
      $region67: #{fwd.1} parent=5 // pred_region
        %s397 = ssub.s32 %s21, 1
        %p398 = scmp.lt.s32.totalorder %s30, 1
        %s399 = scalar_select %p398, %s30, 1
        %p400 = scmp.lt.s32.totalorder %s31, 0
        %s401 = scalar_select %p400, %s31, 0
        %s402 = sadd.s32 %s401, %s399
        %s403 = smul.addr %s402, 8
        %s404 = scalar_lea.vmem %s0, %s403
        %p405 = pneg %p61
        %p406 = pneg %p58
        %p407 = scmp.lt.s32.totalorder %s30, 1
        %s408 = scalar_select %p407, %s30, 1
        %s409 = smul.addr %s408, 4
        %s410 = scalar_lea.vmem %s1, %s409
        %p411 = pneg %p87
        %p412 = pneg %p84
        %p413 = pneg %p108
        %p414 = pneg %p105
        %p415 = pneg %p129
        %p416 = pneg %p126
        %p417 = pneg %p150
        %p418 = pneg %p147
        %p419 = pneg %p171
        %p420 = pneg %p168
        %p421 = pneg %p192
        %p422 = pneg %p189
        %p423 = pneg %p213
        %p424 = pneg %p210
        %p425 = pneg %p234
        %p426 = pneg %p231
        %p427 = pneg %p255
        %p428 = pneg %p252
        %p429 = pneg %p276
        %p430 = pneg %p273
        %p431 = pneg %p297
        %p432 = pneg %p294
        %p433 = pneg %p325
        %p434 = pneg %p322
        %s435 = sand.u32 %s312, 1
        %s436 = scalar_lea.sflag [#allocation4], %s435
        %s437 = sand.u32 %s312, 1
        %s438 = smul.addr %s437, 8
        %s439 = scalar_lea.vmem [#allocation3], %s438
        %p440 = scmp.lt.s32.totalorder %s30, 1
        %s441 = scalar_select %p440, %s30, 1
        %p442 = scmp.lt.s32.totalorder %s31, 0
        %s443 = scalar_select %p442, %s31, 0
        %s444 = sadd.s32 %s443, %s441
        %s445 = smul.addr %s444, 8
        %s446 = scalar_lea.vmem %s0, %s445
        %p447 = scmp.lt.s32.totalorder %s30, 1
        %s448 = scalar_select %p447, %s30, 1
        %s449 = smul.addr %s448, 4
        %s450 = scalar_lea.vmem %s1, %s449
        %v452 = vld [vmem:[%s446] sm:$0xff]
        %p453 = scmp.eq.s32.totalorder %s31, 0
        // Predicated region
        $region69: #{fwd.1} parent=67 // pred_check
          %p454 = pneg %p453
        $region70: #{fwd.1} parent=67 // pred_check_branch
          %456 = sbr.rel (%p454) target = $region72
        $region71: #{fwd.1} parent=67 // pred_region
          %v457 = vld [vmem:[%s450] sm:$0xf]
          %v458 = vld [vmem:[%s4] sm:$0xf]
          %v459 = vld [vmem:[%s4 + $0x4] sm:$0xf]
          %v460 = vld [vmem:[%s4 + $0x8] sm:$0xf]
          %v461 = vld [vmem:[%s4 + $0xc] sm:$0xf]
          %v462 = vld [vmem:[%s5] sm:$0x1]
          %v464 = vlaneseq
          %v465 = vshrl.u32 %v464, 7
          %v466 = vsub.s32 0, %v465
          %v467 = vrot.slane %v462, %v466
          %v473 = vunpack.c.l.b16 %v458
          %v474 = vunpack.c.l.b16 %v459
          %v475 = vunpack.c.l.b16 %v460
          %v476 = vunpack.c.l.b16 %v461
          %v477 = vpack.c.b16 %v474, %v473
          %v478 = vpack.c.b16 %v476, %v475
          %vm481 = vcmask 261120
          %v483 = vsel %vm481, %v457, 0
          %485 = vmatprep.subr.bf16.mxu0 0
          %486 = vmatpush1.bf16.msra.mxu0 %v477
          %487 = vmatprep.subr.bf16.mxu0 0
          %488 = vmatpush1.bf16.msra.mxu0 %v478
          %489 = vmatprep.subr.bf16.mxu0 0
          %490 = vmatpush1.bf16.msra.mxu0 0
          %491 = vmatprep.subr.bf16.mxu0 0
          %492 = vmatpush1.bf16.msra.mxu0 0
          %493 = vmatprep.subr.bf16.mxu0 0
          %494 = vmatpush1.bf16.msra.mxu0 0
          %495 = vmatprep.subr.bf16.mxu0 0
          %496 = vmatpush1.bf16.msra.mxu0 0
          %497 = vmatprep.subr.bf16.mxu0 0
          %498 = vmatpush1.bf16.msra.mxu0 0
          %499 = vmatprep.subr.bf16.mxu0 0
          %500 = vmatpush1.bf16.msra.mxu0 0
          %501 = vmatprep.subr.bf16.mxu0 0
          %502 = vmatpush1.bf16.msra.mxu0 0
          %503 = vmatprep.subr.bf16.mxu0 0
          %504 = vmatpush1.bf16.msra.mxu0 0
          %505 = vmatprep.subr.bf16.mxu0 0
          %506 = vmatpush1.bf16.msra.mxu0 0
          %507 = vmatprep.subr.bf16.mxu0 0
          %508 = vmatpush1.bf16.msra.mxu0 0
          %509 = vmatprep.subr.bf16.mxu0 0
          %510 = vmatpush1.bf16.msra.mxu0 0
          %511 = vmatprep.subr.bf16.mxu0 0
          %512 = vmatpush1.bf16.msra.mxu0 0
          %513 = vmatprep.subr.bf16.mxu0 0
          %514 = vmatpush1.bf16.msra.mxu0 0
          %515 = vmatprep.subr.bf16.mxu0 0
          %516 = vmatpush1.bf16.msra.mxu0 0
          %517 = vmatprep.mubr.bf16.mxu0 0
          %518 = vmatmul.mubr.bf16.gmra.mrb[0].mxu0 %v483
          %v519 = vpop.f32.mrb[0].mxu0
          %v520 = vadd.f32 %v467, %v519
          %v521 = vpop.f32.mrb[0].mxu0
          %v522 = vpop.f32.mrb[0].mxu0
          %v523 = vpop.f32.mrb[0].mxu0
          %524 = vdwg.mxu0
          %v525 = vpack.c.bf16 %v520, %v520
          %vm526 = vcmask 519168
          %527 = vst.msk [vmem:[#allocation2] sm:$0xf] %vm526, %v525
        $region72: #{fwd.1} parent=67 // pred_fallthru
          _
        %v528 = vpack.c.bf16 %v452, %v452
        %v529 = vld [vmem:[%s2] sm:$0xf]
        %v530 = vld [vmem:[%s2 + $0x4] sm:$0xf]
        %v531 = vld [vmem:[%s2 + $0x8] sm:$0xf]
        %v532 = vld [vmem:[%s2 + $0xc] sm:$0xf]
        %v533 = vld [vmem:[%s3] sm:$0x1]
        %v535 = vlaneseq
        %v536 = vshrl.u32 %v535, 7
        %v537 = vsub.s32 0, %v536
        %v538 = vrot.slane %v533, %v537
        %v544 = vunpack.c.l.b16 %v529
        %v545 = vunpack.c.l.b16 %v530
        %v546 = vunpack.c.l.b16 %v531
        %v547 = vunpack.c.l.b16 %v532
        %v548 = vpack.c.b16 %v545, %v544
        %v549 = vpack.c.b16 %v547, %v546
        %vm552 = vcmask 261120
        %v554 = vsel %vm552, %v528, 0
        %556 = vmatprep.subr.bf16.mxu0 0
        %557 = vmatpush1.bf16.msra.mxu0 %v548
        %558 = vmatprep.subr.bf16.mxu0 0
        %559 = vmatpush1.bf16.msra.mxu0 %v549
        %560 = vmatprep.subr.bf16.mxu0 0
        %561 = vmatpush1.bf16.msra.mxu0 0
        %562 = vmatprep.subr.bf16.mxu0 0
        %563 = vmatpush1.bf16.msra.mxu0 0
        %564 = vmatprep.subr.bf16.mxu0 0
        %565 = vmatpush1.bf16.msra.mxu0 0
        %566 = vmatprep.subr.bf16.mxu0 0
        %567 = vmatpush1.bf16.msra.mxu0 0
        %568 = vmatprep.subr.bf16.mxu0 0
        %569 = vmatpush1.bf16.msra.mxu0 0
        %570 = vmatprep.subr.bf16.mxu0 0
        %571 = vmatpush1.bf16.msra.mxu0 0
        %572 = vmatprep.subr.bf16.mxu0 0
        %573 = vmatpush1.bf16.msra.mxu0 0
        %574 = vmatprep.subr.bf16.mxu0 0
        %575 = vmatpush1.bf16.msra.mxu0 0
        %576 = vmatprep.subr.bf16.mxu0 0
        %577 = vmatpush1.bf16.msra.mxu0 0
        %578 = vmatprep.subr.bf16.mxu0 0
        %579 = vmatpush1.bf16.msra.mxu0 0
        %580 = vmatprep.subr.bf16.mxu0 0
        %581 = vmatpush1.bf16.msra.mxu0 0
        %582 = vmatprep.subr.bf16.mxu0 0
        %583 = vmatpush1.bf16.msra.mxu0 0
        %584 = vmatprep.subr.bf16.mxu0 0
        %585 = vmatpush1.bf16.msra.mxu0 0
        %586 = vmatprep.subr.bf16.mxu0 0
        %587 = vmatpush1.bf16.msra.mxu0 0
        %588 = vmatprep.mubr.bf16.mxu0 0
        %589 = vmatmul.mubr.bf16.gmra.mrb[0].mxu0 %v554
        %v590 = vpop.f32.mrb[0].mxu0
        %v591 = vadd.f32 %v538, %v590
        %v592 = vpop.f32.mrb[0].mxu0
        %v593 = vpop.f32.mrb[0].mxu0
        %v594 = vpop.f32.mrb[0].mxu0
        %595 = vdwg.mxu0
        %v596 = vmul.f32 %v591, 0.35355338
        %v597 = vpack.c.bf16 %v596, %v596
        %v598 = vld [vmem:[#allocation2] sm:$0xf]
        %s599 = smul.u32 %s31, 8
        %v600 = vlaneseq
        %v601 = vshrl.u32 %v600, 7
        %v602 = vstv %s599
        %v603 = vadd.s32 %v602, %v601
        %v604 = vlaneseq
        %v605 = vand.u32 %v604, 127
        %vm606 = vcmp.le.s32.totalorder %v605, %v603
        %vm607 = vcmask 64512
        %v609 = vsel %vm607, %v597, 0
        %v612 = vsel %vm607, %v598, 0
        %614 = vmatprep.subr.bf16.mxu0 0
        %615 = vmatpush1.bf16.xpose.msra.mxu0 %v612
        %616 = vmatprep.subr.bf16.mxu0 0
        %617 = vmatpush1.bf16.xpose.msra.mxu0 0
        %618 = vmatprep.subr.bf16.mxu0 0
        %619 = vmatpush1.bf16.xpose.msra.mxu0 0
        %620 = vmatprep.subr.bf16.mxu0 0
        %621 = vmatpush1.bf16.xpose.msra.mxu0 0
        %622 = vmatprep.subr.bf16.mxu0 0
        %623 = vmatpush1.bf16.xpose.msra.mxu0 0
        %624 = vmatprep.subr.bf16.mxu0 0
        %625 = vmatpush1.bf16.xpose.msra.mxu0 0
        %626 = vmatprep.subr.bf16.mxu0 0
        %627 = vmatpush1.bf16.xpose.msra.mxu0 0
        %628 = vmatprep.subr.bf16.mxu0 0
        %629 = vmatpush1.bf16.xpose.msra.mxu0 0
        %630 = vmatprep.subr.bf16.mxu0 0
        %631 = vmatpush1.bf16.xpose.msra.mxu0 0
        %632 = vmatprep.subr.bf16.mxu0 0
        %633 = vmatpush1.bf16.xpose.msra.mxu0 0
        %634 = vmatprep.subr.bf16.mxu0 0
        %635 = vmatpush1.bf16.xpose.msra.mxu0 0
        %636 = vmatprep.subr.bf16.mxu0 0
        %637 = vmatpush1.bf16.xpose.msra.mxu0 0
        %638 = vmatprep.subr.bf16.mxu0 0
        %639 = vmatpush1.bf16.xpose.msra.mxu0 0
        %640 = vmatprep.subr.bf16.mxu0 0
        %641 = vmatpush1.bf16.xpose.msra.mxu0 0
        %642 = vmatprep.subr.bf16.mxu0 0
        %643 = vmatpush1.bf16.xpose.msra.mxu0 0
        %644 = vmatprep.subr.bf16.mxu0 0
        %645 = vmatpush1.bf16.xpose.msra.mxu0 0
        %646 = vmatprep.mubr.bf16.mxu0 0
        %647 = vmatmul.mubr.bf16.gmra.mrb[0].mxu0 %v609
        %v648 = vpop.f32.mrb[0].mxu0
        %v649 = vadd.f32 0.0, %v648
        %v650 = vpop.f32.mrb[0].mxu0
        %v651 = vpop.f32.mrb[0].mxu0
        %v652 = vpop.f32.mrb[0].mxu0
        %653 = vdwg.mxu0
        %v654 = vsel %vm606, %v649, -inf
        %v655 = vsel %vm607, %v654, -inf
        %656 = vmax.xlane.f32.xlu0 %v655
        %v657 = vpop.xlane.xlu0 %656
        %v658 = vsub.f32 %v654, %v657
        %v659 = vmul.f32 %v658, 1.442695
        %v660 = vpow.pop %v659
        %v661 = vsel %vm607, %v660, 0.0
        %662 = vadd.xlane.f32.xlu0 %v661
        %v663 = vpop.xlane.xlu0 %662
        %v664 = vpack.c.bf16 %v660, %v660
        %v666 = vunpack.c.l.b16 %v598
        %v667 = vpack.c.b16 %v666, %v666
        %668 = vrot.lane.b32.xlu0 %v667, 96
        %v669 = vpop.permute.xlu0 %668
        %v671 = vsel %vm607, %v664, 0
        %vm673 = vcmask 1043456
        %v675 = vsel %vm673, %v669, 0
        %677 = vmatprep.subr.bf16.mxu0 0
        %678 = vmatpush1.bf16.msra.mxu0 %v675
        %679 = vmatprep.subr.bf16.mxu0 0
        %680 = vmatpush1.bf16.msra.mxu0 0
        %681 = vmatprep.subr.bf16.mxu0 0
        %682 = vmatpush1.bf16.msra.mxu0 0
        %683 = vmatprep.subr.bf16.mxu0 0
        %684 = vmatpush1.bf16.msra.mxu0 0
        %685 = vmatprep.subr.bf16.mxu0 0
        %686 = vmatpush1.bf16.msra.mxu0 0
        %687 = vmatprep.subr.bf16.mxu0 0
        %688 = vmatpush1.bf16.msra.mxu0 0
        %689 = vmatprep.subr.bf16.mxu0 0
        %690 = vmatpush1.bf16.msra.mxu0 0
        %691 = vmatprep.subr.bf16.mxu0 0
        %692 = vmatpush1.bf16.msra.mxu0 0
        %693 = vmatprep.subr.bf16.mxu0 0
        %694 = vmatpush1.bf16.msra.mxu0 0
        %695 = vmatprep.subr.bf16.mxu0 0
        %696 = vmatpush1.bf16.msra.mxu0 0
        %697 = vmatprep.subr.bf16.mxu0 0
        %698 = vmatpush1.bf16.msra.mxu0 0
        %699 = vmatprep.subr.bf16.mxu0 0
        %700 = vmatpush1.bf16.msra.mxu0 0
        %701 = vmatprep.subr.bf16.mxu0 0
        %702 = vmatpush1.bf16.msra.mxu0 0
        %703 = vmatprep.subr.bf16.mxu0 0
        %704 = vmatpush1.bf16.msra.mxu0 0
        %705 = vmatprep.subr.bf16.mxu0 0
        %706 = vmatpush1.bf16.msra.mxu0 0
        %707 = vmatprep.subr.bf16.mxu0 0
        %708 = vmatpush1.bf16.msra.mxu0 0
        %709 = vmatprep.mubr.bf16.mxu0 0
        %710 = vmatmul.mubr.bf16.gmra.mrb[0].mxu0 %v671
        %v711 = vpop.f32.mrb[0].mxu0
        %v712 = vadd.f32 0.0, %v711
        %v713 = vpop.f32.mrb[0].mxu0
        %v714 = vpop.f32.mrb[0].mxu0
        %v715 = vpop.f32.mrb[0].mxu0
        %716 = vdwg.mxu0
        %v717 = vrcp.pop %v663
        %v718 = vmul.f32 %v712, %v717
        %v719 = vpack.c.bf16 %v718, %v718
        %721 = vrot.lane.b32.xlu0 %v597, 120
        %v722 = vpop.permute.xlu0 %721
        %723 = vrot.lane.b32.xlu0 %v667, 120
        %v724 = vpop.permute.xlu0 %723
        %v726 = vsel %vm607, %v722, 0
        %v729 = vsel %vm607, %v724, 0
        %731 = vmatprep.subr.bf16.mxu0 0
        %732 = vmatpush1.bf16.xpose.msra.mxu0 %v729
        %733 = vmatprep.subr.bf16.mxu0 0
        %734 = vmatpush1.bf16.xpose.msra.mxu0 0
        %735 = vmatprep.subr.bf16.mxu0 0
        %736 = vmatpush1.bf16.xpose.msra.mxu0 0
        %737 = vmatprep.subr.bf16.mxu0 0
        %738 = vmatpush1.bf16.xpose.msra.mxu0 0
        %739 = vmatprep.subr.bf16.mxu0 0
        %740 = vmatpush1.bf16.xpose.msra.mxu0 0
        %741 = vmatprep.subr.bf16.mxu0 0
        %742 = vmatpush1.bf16.xpose.msra.mxu0 0
        %743 = vmatprep.subr.bf16.mxu0 0
        %744 = vmatpush1.bf16.xpose.msra.mxu0 0
        %745 = vmatprep.subr.bf16.mxu0 0
        %746 = vmatpush1.bf16.xpose.msra.mxu0 0
        %747 = vmatprep.subr.bf16.mxu0 0
        %748 = vmatpush1.bf16.xpose.msra.mxu0 0
        %749 = vmatprep.subr.bf16.mxu0 0
        %750 = vmatpush1.bf16.xpose.msra.mxu0 0
        %751 = vmatprep.subr.bf16.mxu0 0
        %752 = vmatpush1.bf16.xpose.msra.mxu0 0
        %753 = vmatprep.subr.bf16.mxu0 0
        %754 = vmatpush1.bf16.xpose.msra.mxu0 0
        %755 = vmatprep.subr.bf16.mxu0 0
        %756 = vmatpush1.bf16.xpose.msra.mxu0 0
        %757 = vmatprep.subr.bf16.mxu0 0
        %758 = vmatpush1.bf16.xpose.msra.mxu0 0
        %759 = vmatprep.subr.bf16.mxu0 0
        %760 = vmatpush1.bf16.xpose.msra.mxu0 0
        %761 = vmatprep.subr.bf16.mxu0 0
        %762 = vmatpush1.bf16.xpose.msra.mxu0 0
        %763 = vmatprep.mubr.bf16.mxu0 0
        %764 = vmatmul.mubr.bf16.gmra.mrb[0].mxu0 %v726
        %v765 = vpop.f32.mrb[0].mxu0
        %v766 = vadd.f32 0.0, %v765
        %v767 = vpop.f32.mrb[0].mxu0
        %v768 = vpop.f32.mrb[0].mxu0
        %v769 = vpop.f32.mrb[0].mxu0
        %770 = vdwg.mxu0
        %v771 = vsel %vm606, %v766, -inf
        %v772 = vsel %vm607, %v771, -inf
        %773 = vmax.xlane.f32.xlu0 %v772
        %v774 = vpop.xlane.xlu0 %773
        %v775 = vsub.f32 %v771, %v774
        %v776 = vmul.f32 %v775, 1.442695
        %v777 = vpow.pop %v776
        %v778 = vsel %vm607, %v777, 0.0
        %779 = vadd.xlane.f32.xlu0 %v778
        %v780 = vpop.xlane.xlu0 %779
        %v781 = vpack.c.bf16 %v777, %v777
        %782 = vrot.lane.b32.xlu0 %v667, 88
        %v783 = vpop.permute.xlu0 %782
        %v785 = vsel %vm607, %v781, 0
        %v788 = vsel %vm673, %v783, 0
        %790 = vmatprep.subr.bf16.mxu0 0
        %791 = vmatpush1.bf16.msra.mxu0 %v788
        %792 = vmatprep.subr.bf16.mxu0 0
        %793 = vmatpush1.bf16.msra.mxu0 0
        %794 = vmatprep.subr.bf16.mxu0 0
        %795 = vmatpush1.bf16.msra.mxu0 0
        %796 = vmatprep.subr.bf16.mxu0 0
        %797 = vmatpush1.bf16.msra.mxu0 0
        %798 = vmatprep.subr.bf16.mxu0 0
        %799 = vmatpush1.bf16.msra.mxu0 0
        %800 = vmatprep.subr.bf16.mxu0 0
        %801 = vmatpush1.bf16.msra.mxu0 0
        %802 = vmatprep.subr.bf16.mxu0 0
        %803 = vmatpush1.bf16.msra.mxu0 0
        %804 = vmatprep.subr.bf16.mxu0 0
        %805 = vmatpush1.bf16.msra.mxu0 0
        %806 = vmatprep.subr.bf16.mxu0 0
        %807 = vmatpush1.bf16.msra.mxu0 0
        %808 = vmatprep.subr.bf16.mxu0 0
        %809 = vmatpush1.bf16.msra.mxu0 0
        %810 = vmatprep.subr.bf16.mxu0 0
        %811 = vmatpush1.bf16.msra.mxu0 0
        %812 = vmatprep.subr.bf16.mxu0 0
        %813 = vmatpush1.bf16.msra.mxu0 0
        %814 = vmatprep.subr.bf16.mxu0 0
        %815 = vmatpush1.bf16.msra.mxu0 0
        %816 = vmatprep.subr.bf16.mxu0 0
        %817 = vmatpush1.bf16.msra.mxu0 0
        %818 = vmatprep.subr.bf16.mxu0 0
        %819 = vmatpush1.bf16.msra.mxu0 0
        %820 = vmatprep.subr.bf16.mxu0 0
        %821 = vmatpush1.bf16.msra.mxu0 0
        %822 = vmatprep.mubr.bf16.mxu0 0
        %823 = vmatmul.mubr.bf16.gmra.mrb[0].mxu0 %v785
        %v824 = vpop.f32.mrb[0].mxu0
        %v825 = vadd.f32 0.0, %v824
        %v826 = vpop.f32.mrb[0].mxu0
        %v827 = vpop.f32.mrb[0].mxu0
        %v828 = vpop.f32.mrb[0].mxu0
        %829 = vdwg.mxu0
        %v830 = vrcp.pop %v780
        %v831 = vmul.f32 %v825, %v830
        %v832 = vpack.c.bf16 %v831, %v831
        %833 = vrot.lane.b32.xlu0 %v597, 112
        %v834 = vpop.permute.xlu0 %833
        %835 = vrot.lane.b32.xlu0 %v667, 112
        %v836 = vpop.permute.xlu0 %835
        %v838 = vsel %vm607, %v834, 0
        %v841 = vsel %vm607, %v836, 0
        %843 = vmatprep.subr.bf16.mxu0 0
        %844 = vmatpush1.bf16.xpose.msra.mxu0 %v841
        %845 = vmatprep.subr.bf16.mxu0 0
        %846 = vmatpush1.bf16.xpose.msra.mxu0 0
        %847 = vmatprep.subr.bf16.mxu0 0
        %848 = vmatpush1.bf16.xpose.msra.mxu0 0
        %849 = vmatprep.subr.bf16.mxu0 0
        %850 = vmatpush1.bf16.xpose.msra.mxu0 0
        %851 = vmatprep.subr.bf16.mxu0 0
        %852 = vmatpush1.bf16.xpose.msra.mxu0 0
        %853 = vmatprep.subr.bf16.mxu0 0
        %854 = vmatpush1.bf16.xpose.msra.mxu0 0
        %855 = vmatprep.subr.bf16.mxu0 0
        %856 = vmatpush1.bf16.xpose.msra.mxu0 0
        %857 = vmatprep.subr.bf16.mxu0 0
        %858 = vmatpush1.bf16.xpose.msra.mxu0 0
        %859 = vmatprep.subr.bf16.mxu0 0
        %860 = vmatpush1.bf16.xpose.msra.mxu0 0
        %861 = vmatprep.subr.bf16.mxu0 0
        %862 = vmatpush1.bf16.xpose.msra.mxu0 0
        %863 = vmatprep.subr.bf16.mxu0 0
        %864 = vmatpush1.bf16.xpose.msra.mxu0 0
        %865 = vmatprep.subr.bf16.mxu0 0
        %866 = vmatpush1.bf16.xpose.msra.mxu0 0
        %867 = vmatprep.subr.bf16.mxu0 0
        %868 = vmatpush1.bf16.xpose.msra.mxu0 0
        %869 = vmatprep.subr.bf16.mxu0 0
        %870 = vmatpush1.bf16.xpose.msra.mxu0 0
        %871 = vmatprep.subr.bf16.mxu0 0
        %872 = vmatpush1.bf16.xpose.msra.mxu0 0
        %873 = vmatprep.subr.bf16.mxu0 0
        %874 = vmatpush1.bf16.xpose.msra.mxu0 0
        %875 = vmatprep.mubr.bf16.mxu0 0
        %876 = vmatmul.mubr.bf16.gmra.mrb[0].mxu0 %v838
        %v877 = vpop.f32.mrb[0].mxu0
        %v878 = vadd.f32 0.0, %v877
        %v879 = vpop.f32.mrb[0].mxu0
        %v880 = vpop.f32.mrb[0].mxu0
        %v881 = vpop.f32.mrb[0].mxu0
        %882 = vdwg.mxu0
        %v883 = vsel %vm606, %v878, -inf
        %v884 = vsel %vm607, %v883, -inf
        %885 = vmax.xlane.f32.xlu0 %v884
        %v886 = vpop.xlane.xlu0 %885
        %v887 = vsub.f32 %v883, %v886
        %v888 = vmul.f32 %v887, 1.442695
        %v889 = vpow.pop %v888
        %v890 = vsel %vm607, %v889, 0.0
        %891 = vadd.xlane.f32.xlu0 %v890
        %v892 = vpop.xlane.xlu0 %891
        %v893 = vpack.c.bf16 %v889, %v889
        %894 = vrot.lane.b32.xlu0 %v667, 80
        %v895 = vpop.permute.xlu0 %894
        %v897 = vsel %vm607, %v893, 0
        %v900 = vsel %vm673, %v895, 0
        %902 = vmatprep.subr.bf16.mxu0 0
        %903 = vmatpush1.bf16.msra.mxu0 %v900
        %904 = vmatprep.subr.bf16.mxu0 0
        %905 = vmatpush1.bf16.msra.mxu0 0
        %906 = vmatprep.subr.bf16.mxu0 0
        %907 = vmatpush1.bf16.msra.mxu0 0
        %908 = vmatprep.subr.bf16.mxu0 0
        %909 = vmatpush1.bf16.msra.mxu0 0
        %910 = vmatprep.subr.bf16.mxu0 0
        %911 = vmatpush1.bf16.msra.mxu0 0
        %912 = vmatprep.subr.bf16.mxu0 0
        %913 = vmatpush1.bf16.msra.mxu0 0
        %914 = vmatprep.subr.bf16.mxu0 0
        %915 = vmatpush1.bf16.msra.mxu0 0
        %916 = vmatprep.subr.bf16.mxu0 0
        %917 = vmatpush1.bf16.msra.mxu0 0
        %918 = vmatprep.subr.bf16.mxu0 0
        %919 = vmatpush1.bf16.msra.mxu0 0
        %920 = vmatprep.subr.bf16.mxu0 0
        %921 = vmatpush1.bf16.msra.mxu0 0
        %922 = vmatprep.subr.bf16.mxu0 0
        %923 = vmatpush1.bf16.msra.mxu0 0
        %924 = vmatprep.subr.bf16.mxu0 0
        %925 = vmatpush1.bf16.msra.mxu0 0
        %926 = vmatprep.subr.bf16.mxu0 0
        %927 = vmatpush1.bf16.msra.mxu0 0
        %928 = vmatprep.subr.bf16.mxu0 0
        %929 = vmatpush1.bf16.msra.mxu0 0
        %930 = vmatprep.subr.bf16.mxu0 0
        %931 = vmatpush1.bf16.msra.mxu0 0
        %932 = vmatprep.subr.bf16.mxu0 0
        %933 = vmatpush1.bf16.msra.mxu0 0
        %934 = vmatprep.mubr.bf16.mxu0 0
        %935 = vmatmul.mubr.bf16.gmra.mrb[0].mxu0 %v897
        %v936 = vpop.f32.mrb[0].mxu0
        %v937 = vadd.f32 0.0, %v936
        %v938 = vpop.f32.mrb[0].mxu0
        %v939 = vpop.f32.mrb[0].mxu0
        %v940 = vpop.f32.mrb[0].mxu0
        %941 = vdwg.mxu0
        %v942 = vrcp.pop %v892
        %v943 = vmul.f32 %v937, %v942
        %v944 = vpack.c.bf16 %v943, %v943
        %945 = vrot.lane.b32.xlu0 %v597, 104
        %v946 = vpop.permute.xlu0 %945
        %947 = vrot.lane.b32.xlu0 %v667, 104
        %v948 = vpop.permute.xlu0 %947
        %v950 = vsel %vm607, %v946, 0
        %v953 = vsel %vm607, %v948, 0
        %955 = vmatprep.subr.bf16.mxu0 0
        %956 = vmatpush1.bf16.xpose.msra.mxu0 %v953
        %957 = vmatprep.subr.bf16.mxu0 0
        %958 = vmatpush1.bf16.xpose.msra.mxu0 0
        %959 = vmatprep.subr.bf16.mxu0 0
        %960 = vmatpush1.bf16.xpose.msra.mxu0 0
        %961 = vmatprep.subr.bf16.mxu0 0
        %962 = vmatpush1.bf16.xpose.msra.mxu0 0
        %963 = vmatprep.subr.bf16.mxu0 0
        %964 = vmatpush1.bf16.xpose.msra.mxu0 0
        %965 = vmatprep.subr.bf16.mxu0 0
        %966 = vmatpush1.bf16.xpose.msra.mxu0 0
        %967 = vmatprep.subr.bf16.mxu0 0
        %968 = vmatpush1.bf16.xpose.msra.mxu0 0
        %969 = vmatprep.subr.bf16.mxu0 0
        %970 = vmatpush1.bf16.xpose.msra.mxu0 0
        %971 = vmatprep.subr.bf16.mxu0 0
        %972 = vmatpush1.bf16.xpose.msra.mxu0 0
        %973 = vmatprep.subr.bf16.mxu0 0
        %974 = vmatpush1.bf16.xpose.msra.mxu0 0
        %975 = vmatprep.subr.bf16.mxu0 0
        %976 = vmatpush1.bf16.xpose.msra.mxu0 0
        %977 = vmatprep.subr.bf16.mxu0 0
        %978 = vmatpush1.bf16.xpose.msra.mxu0 0
        %979 = vmatprep.subr.bf16.mxu0 0
        %980 = vmatpush1.bf16.xpose.msra.mxu0 0
        %981 = vmatprep.subr.bf16.mxu0 0
        %982 = vmatpush1.bf16.xpose.msra.mxu0 0
        %983 = vmatprep.subr.bf16.mxu0 0
        %984 = vmatpush1.bf16.xpose.msra.mxu0 0
        %985 = vmatprep.subr.bf16.mxu0 0
        %986 = vmatpush1.bf16.xpose.msra.mxu0 0
        %987 = vmatprep.mubr.bf16.mxu0 0
        %988 = vmatmul.mubr.bf16.gmra.mrb[0].mxu0 %v950
        %v989 = vpop.f32.mrb[0].mxu0
        %v990 = vadd.f32 0.0, %v989
        %v991 = vpop.f32.mrb[0].mxu0
        %v992 = vpop.f32.mrb[0].mxu0
        %v993 = vpop.f32.mrb[0].mxu0
        %994 = vdwg.mxu0
        %v995 = vsel %vm606, %v990, -inf
        %v996 = vsel %vm607, %v995, -inf
        %997 = vmax.xlane.f32.xlu0 %v996
        %v998 = vpop.xlane.xlu0 %997
        %v999 = vsub.f32 %v995, %v998
        %v1000 = vmul.f32 %v999, 1.442695
        %v1001 = vpow.pop %v1000
        %v1002 = vsel %vm607, %v1001, 0.0
        %1003 = vadd.xlane.f32.xlu0 %v1002
        %v1004 = vpop.xlane.xlu0 %1003
        %v1005 = vpack.c.bf16 %v1001, %v1001
        %1006 = vrot.lane.b32.xlu0 %v667, 72
        %v1007 = vpop.permute.xlu0 %1006
        %v1009 = vsel %vm607, %v1005, 0
        %v1012 = vsel %vm673, %v1007, 0
        %1014 = vmatprep.subr.bf16.mxu0 0
        %1015 = vmatpush1.bf16.msra.mxu0 %v1012
        %1016 = vmatprep.subr.bf16.mxu0 0
        %1017 = vmatpush1.bf16.msra.mxu0 0
        %1018 = vmatprep.subr.bf16.mxu0 0
        %1019 = vmatpush1.bf16.msra.mxu0 0
        %1020 = vmatprep.subr.bf16.mxu0 0
        %1021 = vmatpush1.bf16.msra.mxu0 0
        %1022 = vmatprep.subr.bf16.mxu0 0
        %1023 = vmatpush1.bf16.msra.mxu0 0
        %1024 = vmatprep.subr.bf16.mxu0 0
        %1025 = vmatpush1.bf16.msra.mxu0 0
        %1026 = vmatprep.subr.bf16.mxu0 0
        %1027 = vmatpush1.bf16.msra.mxu0 0
        %1028 = vmatprep.subr.bf16.mxu0 0
        %1029 = vmatpush1.bf16.msra.mxu0 0
        %1030 = vmatprep.subr.bf16.mxu0 0
        %1031 = vmatpush1.bf16.msra.mxu0 0
        %1032 = vmatprep.subr.bf16.mxu0 0
        %1033 = vmatpush1.bf16.msra.mxu0 0
        %1034 = vmatprep.subr.bf16.mxu0 0
        %1035 = vmatpush1.bf16.msra.mxu0 0
        %1036 = vmatprep.subr.bf16.mxu0 0
        %1037 = vmatpush1.bf16.msra.mxu0 0
        %1038 = vmatprep.subr.bf16.mxu0 0
        %1039 = vmatpush1.bf16.msra.mxu0 0
        %1040 = vmatprep.subr.bf16.mxu0 0
        %1041 = vmatpush1.bf16.msra.mxu0 0
        %1042 = vmatprep.subr.bf16.mxu0 0
        %1043 = vmatpush1.bf16.msra.mxu0 0
        %1044 = vmatprep.subr.bf16.mxu0 0
        %1045 = vmatpush1.bf16.msra.mxu0 0
        %1046 = vmatprep.mubr.bf16.mxu0 0
        %1047 = vmatmul.mubr.bf16.gmra.mrb[0].mxu0 %v1009
        %v1048 = vpop.f32.mrb[0].mxu0
        %v1049 = vadd.f32 0.0, %v1048
        %v1050 = vpop.f32.mrb[0].mxu0
        %v1051 = vpop.f32.mrb[0].mxu0
        %v1052 = vpop.f32.mrb[0].mxu0
        %1053 = vdwg.mxu0
        %v1054 = vrcp.pop %v1004
        %v1055 = vmul.f32 %v1049, %v1054
        %v1056 = vpack.c.bf16 %v1055, %v1055
        %1058 = vrot.lane.b32.xlu0 %v832, 8
        %v1059 = vpop.permute.xlu0 %1058
        %1061 = vrot.lane.b32.xlu0 %v944, 16
        %v1062 = vpop.permute.xlu0 %1061
        %1064 = vrot.lane.b32.xlu0 %v1056, 24
        %v1065 = vpop.permute.xlu0 %1064
        %v1068 = vsel %vm607, %v719, %v1059
        %vm1069 = vcmask 130048
        %v1071 = vsel %vm1069, %v1068, %v1062
        %vm1072 = vcmask 195584
        %v1074 = vsel %vm1072, %v1071, %v1065
        %v1075 = vld [vmem:[%s6] sm:$0xf]
        %v1076 = vld [vmem:[%s6 + $0x4] sm:$0xf]
        %v1077 = vld [vmem:[%s6 + $0x8] sm:$0xf]
        %v1078 = vld [vmem:[%s6 + $0xc] sm:$0xf]
        %v1079 = vld [vmem:[%s7] sm:$0x1]
        %v1081 = vlaneseq
        %v1082 = vshrl.u32 %v1081, 7
        %v1083 = vsub.s32 0, %v1082
        %v1084 = vrot.slane %v1079, %v1083
        %v1090 = vunpack.c.l.b16 %v1075
        %v1091 = vunpack.c.l.b16 %v1076
        %v1092 = vunpack.c.l.b16 %v1077
        %v1093 = vunpack.c.l.b16 %v1078
        %v1094 = vpack.c.b16 %v1091, %v1090
        %v1095 = vpack.c.b16 %v1093, %v1092
        %v1098 = vsel %vm552, %v1074, 0
        %1100 = vmatprep.subr.bf16.mxu0 0
        %1101 = vmatpush1.bf16.msra.mxu0 %v1094
        %1102 = vmatprep.subr.bf16.mxu0 0
        %1103 = vmatpush1.bf16.msra.mxu0 %v1095
        %1104 = vmatprep.subr.bf16.mxu0 0
        %1105 = vmatpush1.bf16.msra.mxu0 0
        %1106 = vmatprep.subr.bf16.mxu0 0
        %1107 = vmatpush1.bf16.msra.mxu0 0
        %1108 = vmatprep.subr.bf16.mxu0 0
        %1109 = vmatpush1.bf16.msra.mxu0 0
        %1110 = vmatprep.subr.bf16.mxu0 0
        %1111 = vmatpush1.bf16.msra.mxu0 0
        %1112 = vmatprep.subr.bf16.mxu0 0
        %1113 = vmatpush1.bf16.msra.mxu0 0
        %1114 = vmatprep.subr.bf16.mxu0 0
        %1115 = vmatpush1.bf16.msra.mxu0 0
        %1116 = vmatprep.subr.bf16.mxu0 0
        %1117 = vmatpush1.bf16.msra.mxu0 0
        %1118 = vmatprep.subr.bf16.mxu0 0
        %1119 = vmatpush1.bf16.msra.mxu0 0
        %1120 = vmatprep.subr.bf16.mxu0 0
        %1121 = vmatpush1.bf16.msra.mxu0 0
        %1122 = vmatprep.subr.bf16.mxu0 0
        %1123 = vmatpush1.bf16.msra.mxu0 0
        %1124 = vmatprep.subr.bf16.mxu0 0
        %1125 = vmatpush1.bf16.msra.mxu0 0
        %1126 = vmatprep.subr.bf16.mxu0 0
        %1127 = vmatpush1.bf16.msra.mxu0 0
        %1128 = vmatprep.subr.bf16.mxu0 0
        %1129 = vmatpush1.bf16.msra.mxu0 0
        %1130 = vmatprep.subr.bf16.mxu0 0
        %1131 = vmatpush1.bf16.msra.mxu0 0
        %1132 = vmatprep.mubr.bf16.mxu0 0
        %1133 = vmatmul.mubr.bf16.gmra.mrb[0].mxu0 %v1098
        %v1134 = vpop.f32.mrb[0].mxu0
        %v1135 = vadd.f32 %v1084, %v1134
        %v1136 = vpop.f32.mrb[0].mxu0
        %v1137 = vpop.f32.mrb[0].mxu0
        %v1138 = vpop.f32.mrb[0].mxu0
        %1139 = vdwg.mxu0
        %v1140 = vadd.f32 %v452, %v1135
        %v1141 = vpack.c.bf16 %v1140, %v1140
        %v1142 = vld [vmem:[%s8] sm:$0xf]
        %v1143 = vld [vmem:[%s8 + $0x4] sm:$0xf]
        %v1144 = vld [vmem:[%s8 + $0x8] sm:$0xf]
        %v1145 = vld [vmem:[%s8 + $0xc] sm:$0xf]
        %v1146 = vld [vmem:[%s9] sm:$0x1]
        %v1148 = vlaneseq
        %v1149 = vshrl.u32 %v1148, 7
        %v1150 = vsub.s32 0, %v1149
        %v1151 = vrot.slane %v1146, %v1150
        %v1157 = vunpack.c.l.b16 %v1142
        %v1158 = vunpack.c.l.b16 %v1143
        %v1159 = vunpack.c.l.b16 %v1144
        %v1160 = vunpack.c.l.b16 %v1145
        %v1161 = vpack.c.b16 %v1158, %v1157
        %v1162 = vpack.c.b16 %v1160, %v1159
        %v1166 = vsel %vm552, %v1141, 0
        %1168 = vmatprep.subr.bf16.mxu0 0
        %1169 = vmatpush1.bf16.msra.mxu0 %v1161
        %1170 = vmatprep.subr.bf16.mxu0 0
        %1171 = vmatpush1.bf16.msra.mxu0 %v1162
        %1172 = vmatprep.subr.bf16.mxu0 0
        %1173 = vmatpush1.bf16.msra.mxu0 0
        %1174 = vmatprep.subr.bf16.mxu0 0
        %1175 = vmatpush1.bf16.msra.mxu0 0
        %1176 = vmatprep.subr.bf16.mxu0 0
        %1177 = vmatpush1.bf16.msra.mxu0 0
        %1178 = vmatprep.subr.bf16.mxu0 0
        %1179 = vmatpush1.bf16.msra.mxu0 0
        %1180 = vmatprep.subr.bf16.mxu0 0
        %1181 = vmatpush1.bf16.msra.mxu0 0
        %1182 = vmatprep.subr.bf16.mxu0 0
        %1183 = vmatpush1.bf16.msra.mxu0 0
        %1184 = vmatprep.subr.bf16.mxu0 0
        %1185 = vmatpush1.bf16.msra.mxu0 0
        %1186 = vmatprep.subr.bf16.mxu0 0
        %1187 = vmatpush1.bf16.msra.mxu0 0
        %1188 = vmatprep.subr.bf16.mxu0 0
        %1189 = vmatpush1.bf16.msra.mxu0 0
        %1190 = vmatprep.subr.bf16.mxu0 0
        %1191 = vmatpush1.bf16.msra.mxu0 0
        %1192 = vmatprep.subr.bf16.mxu0 0
        %1193 = vmatpush1.bf16.msra.mxu0 0
        %1194 = vmatprep.subr.bf16.mxu0 0
        %1195 = vmatpush1.bf16.msra.mxu0 0
        %1196 = vmatprep.subr.bf16.mxu0 0
        %1197 = vmatpush1.bf16.msra.mxu0 0
        %1198 = vmatprep.subr.bf16.mxu0 0
        %1199 = vmatpush1.bf16.msra.mxu0 0
        %1200 = vmatprep.mubr.bf16.mxu0 0
        %1201 = vmatmul.mubr.bf16.gmra.mrb[0].mxu0 %v1166
        %v1202 = vpop.f32.mrb[0].mxu0
        %v1203 = vadd.f32 %v1151, %v1202
        %v1204 = vpop.f32.mrb[0].mxu0
        %v1205 = vpop.f32.mrb[0].mxu0
        %v1206 = vpop.f32.mrb[0].mxu0
        %1207 = vdwg.mxu0
        %v1208 = vmax.f32 %v1203, 0.0
        %v1209 = vpack.c.bf16 %v1208, %v1208
        %v1210 = vld [vmem:[%s10] sm:$0xf]
        %v1211 = vld [vmem:[%s10 + $0x4] sm:$0xf]
        %v1212 = vld [vmem:[%s10 + $0x8] sm:$0xf]
        %v1213 = vld [vmem:[%s10 + $0xc] sm:$0xf]
        %v1214 = vld [vmem:[%s10 + $0x10] sm:$0xf]
        %v1215 = vld [vmem:[%s10 + $0x14] sm:$0xf]
        %v1216 = vld [vmem:[%s10 + $0x18] sm:$0xf]
        %v1217 = vld [vmem:[%s10 + $0x1c] sm:$0xf]
        %v1218 = vld [vmem:[%s10 + $0x20] sm:$0xf]
        %v1219 = vld [vmem:[%s10 + $0x24] sm:$0xf]
        %v1220 = vld [vmem:[%s10 + $0x28] sm:$0xf]
        %v1221 = vld [vmem:[%s10 + $0x2c] sm:$0xf]
        %v1222 = vld [vmem:[%s10 + $0x30] sm:$0xf]
        %v1223 = vld [vmem:[%s10 + $0x34] sm:$0xf]
        %v1224 = vld [vmem:[%s10 + $0x38] sm:$0xf]
        %v1225 = vld [vmem:[%s10 + $0x3c] sm:$0xf]
        %v1226 = vld [vmem:[%s11] sm:$0x1]
        %v1228 = vlaneseq
        %v1229 = vshrl.u32 %v1228, 7
        %v1230 = vsub.s32 0, %v1229
        %v1231 = vrot.slane %v1226, %v1230
        %v1249 = vunpack.c.l.b16 %v1210
        %v1250 = vunpack.c.l.b16 %v1211
        %v1251 = vunpack.c.l.b16 %v1212
        %v1252 = vunpack.c.l.b16 %v1213
        %v1253 = vunpack.c.l.b16 %v1214
        %v1254 = vunpack.c.l.b16 %v1215
        %v1255 = vunpack.c.l.b16 %v1216
        %v1256 = vunpack.c.l.b16 %v1217
        %v1257 = vunpack.c.l.b16 %v1218
        %v1258 = vunpack.c.l.b16 %v1219
        %v1259 = vunpack.c.l.b16 %v1220
        %v1260 = vunpack.c.l.b16 %v1221
        %v1261 = vunpack.c.l.b16 %v1222
        %v1262 = vunpack.c.l.b16 %v1223
        %v1263 = vunpack.c.l.b16 %v1224
        %v1264 = vunpack.c.l.b16 %v1225
        %v1265 = vpack.c.b16 %v1250, %v1249
        %v1266 = vpack.c.b16 %v1252, %v1251
        %v1267 = vpack.c.b16 %v1254, %v1253
        %v1268 = vpack.c.b16 %v1256, %v1255
        %v1269 = vpack.c.b16 %v1258, %v1257
        %v1270 = vpack.c.b16 %v1260, %v1259
        %v1271 = vpack.c.b16 %v1262, %v1261
        %v1272 = vpack.c.b16 %v1264, %v1263
        %1281 = vmatprep.subr.bf16.mxu0 0
        %1282 = vmatpush1.bf16.msra.mxu0 %v1265
        %1283 = vmatprep.subr.bf16.mxu0 0
        %1284 = vmatpush1.bf16.msra.mxu0 %v1266
        %1285 = vmatprep.subr.bf16.mxu0 0
        %1286 = vmatpush1.bf16.msra.mxu0 %v1267
        %1287 = vmatprep.subr.bf16.mxu0 0
        %1288 = vmatpush1.bf16.msra.mxu0 %v1268
        %1289 = vmatprep.subr.bf16.mxu0 0
        %1290 = vmatpush1.bf16.msra.mxu0 %v1269
        %1291 = vmatprep.subr.bf16.mxu0 0
        %1292 = vmatpush1.bf16.msra.mxu0 %v1270
        %1293 = vmatprep.subr.bf16.mxu0 0
        %1294 = vmatpush1.bf16.msra.mxu0 %v1271
        %1295 = vmatprep.subr.bf16.mxu0 0
        %1296 = vmatpush1.bf16.msra.mxu0 %v1272
        %1297 = vmatprep.subr.bf16.mxu0 0
        %1298 = vmatpush1.bf16.msra.mxu0 0
        %1299 = vmatprep.subr.bf16.mxu0 0
        %1300 = vmatpush1.bf16.msra.mxu0 0
        %1301 = vmatprep.subr.bf16.mxu0 0
        %1302 = vmatpush1.bf16.msra.mxu0 0
        %1303 = vmatprep.subr.bf16.mxu0 0
        %1304 = vmatpush1.bf16.msra.mxu0 0
        %1305 = vmatprep.subr.bf16.mxu0 0
        %1306 = vmatpush1.bf16.msra.mxu0 0
        %1307 = vmatprep.subr.bf16.mxu0 0
        %1308 = vmatpush1.bf16.msra.mxu0 0
        %1309 = vmatprep.subr.bf16.mxu0 0
        %1310 = vmatpush1.bf16.msra.mxu0 0
        %1311 = vmatprep.subr.bf16.mxu0 0
        %1312 = vmatpush1.bf16.msra.mxu0 0
        %1313 = vmatprep.mubr.bf16.mxu0 0
        %1314 = vmatmul.mubr.bf16.gmra.mrb[0].mxu0 %v1209
        %v1315 = vpop.f32.mrb[0].mxu0
        %v1316 = vadd.f32 %v1231, %v1315
        %v1317 = vpop.f32.mrb[0].mxu0
        %v1318 = vpop.f32.mrb[0].mxu0
        %v1319 = vpop.f32.mrb[0].mxu0
        %1320 = vdwg.mxu0
        %v1321 = vadd.f32 %v1140, %v1316
        %1322 = vst.msk [vmem:[%s439] sm:$0xff] %vm552, %v1321
        %s1323 = sand.u32 %s312, 1
        %s1324 = scalar_lea.sflag [#allocation4], %s1323
        %s1325 = sand.u32 %s312, 1
        %s1326 = smul.addr %s1325, 8
        %s1327 = scalar_lea.vmem [#allocation3], %s1326
        // Predicated region
        $region73: #{fwd.1} parent=67 // pred_check
          %p1328 = pneg %p322
        $region74: #{fwd.1} parent=67 // pred_check_branch
          %1330 = sbr.rel (%p1328) target = $region76
        $region75: #{fwd.1} parent=67 // pred_region
          %s1332 = ssub.s32 128, 128
          %1333 = vsyncadd %s1324, %s1332
          %s1334 = sadd.s32 %s31, %s30
          %s1335 = smul.addr %s1334, 128
          %s1336 = scalar_lea.hbm %s12, %s1335
          %s1338 = sshll.u32 %s1327, 4
          %s1339 = int_to_ptr.vmem [resolvable:$true] %s1338
          %1341 = dma.vmem_to_hbm [thread:$0]  %s1339, 128, %s1336, %s1324
        $region76: #{fwd.1} parent=67 // pred_fallthru
          _
      $region68: #{fwd.1} parent=5 // pred_fallthru
        _
      %p1342 = scmp.le.s32.totalorder 2, %s21
      // Predicated region
      $region77: #{fwd.1} parent=5 // pred_check
        %p1343 = pneg %p1342
      $region78: #{fwd.1} parent=5 // pred_check_branch
        %1345 = sbr.rel (%p1343) target = $region80
      $region79: #{fwd.1} parent=5 // pred_region
        %s1346 = ssub.s32 %s21, 2
        // Predicated region
        $region81: #{fwd.1} parent=79 // pred_check
          %p1347 = pneg %p328
        $region82: #{fwd.1} parent=79 // pred_check_branch
          %1349 = sbr.rel (%p1347) target = $region84
        $region83: #{fwd.1} parent=79 // pred_region
          %s1350 = sand.u32 %s313, 1
          %s1351 = scalar_lea.sflag [#allocation4], %s1350
          %s1352 = sand.u32 %s313, 1
          %s1353 = smul.addr %s1352, 8
          %s1354 = scalar_lea.vmem [#allocation3], %s1353
          %1355 = dma.done %s1351, 128
        $region84: #{fwd.1} parent=79 // pred_fallthru
          _
      $region80: #{fwd.1} parent=5 // pred_fallthru
        _
    $region6: #{fwd.1} parent=1 // loop_footer
      %s25 = sadd.s32 1, %s21
    $region7: #{fwd.1} parent=1 // loop_footer_branch
      %20 = sbr.rel target = $region3
    $region8: #{fwd.1} parent=1 // loop_exit
      _
    %1356 = vsyncpa [#allocation4], 1
    %s1357 = scalar_lea.sflag [#allocation4], 1
    %1358 = vsyncpa %s1357, 1

</llo_original>
